<compile_context>
chip_gen: v7x
topology: tpu7x:2x2x1
jax: 0.10.0
libtpu: 0.0.40
codegen_flags: <defaults>
</compile_context>

<pallas_src>
import functools

import jax
import jax.numpy as jnp
from jax.experimental import pallas as pl
from jax.experimental.pallas import tpu as pltpu  # noqa: F401  (TPU backend)


# ------------------------------ fused kernel -------------------------------

def _gat_node_fused_kernel(*refs, num_layer, num_heads, head_dim,
                           negative_slope, ln_eps):
    # refs = (adj_t, diag_sel, rep_sel, head_block, E, ET, x,
    #         w_aug[0 .. num_layer], wp, bp, out)
    (adj_t_ref, diag_sel_ref, rep_sel_ref, head_block_ref,
     e_ref, et_ref, x_ref) = refs[:7]
    w_refs = refs[7:8 + num_layer]
    wp_ref = refs[8 + num_layer]
    bp_ref = refs[9 + num_layer]
    out_ref = refs[10 + num_layer]

    H, D = num_heads, head_dim
    HD = H * D

    # ---- loop-invariant constants (read once, reused by every GAT layer) ----
    adj_t = adj_t_ref[...]            # (N, H*N): adj tiled per head (host-built)
    edge_mask = adj_t > 0.0           # computed ONCE, reused in both where sites
    diag_sel = diag_sel_ref[...]      # (N, H*N):  [j, h*N+j'] = (j == j')
    rep_sel = rep_sel_ref[...]        # (H*N, N):  [h*N+j, j'] = (j == j')
    head_block = head_block_ref[...]  # (H*N, H*D): [h*N+j, h'*D+d] = (h == h')
    E = e_ref[...]                    # (H, H*N):  [h, h'*N+j] = (h == h')
    ET = et_ref[...]                  # (H*N, H):  E transposed (host-built)
    N = diag_sel.shape[0]
    ones_row = jnp.ones((1, N), jnp.float32)
    neg_big = jnp.float32(-1e30)      # f32-safe mask; switch to -inf for bf16
    tiny = jnp.float32(1e-20)

    def gat_layer(h_in, w_aug, apply_ln):
        # Single MXU matmul: [wh | el | er] = h_in @ [W | W@attn_l | W@attn_r]
        xw = jnp.dot(h_in, w_aug, preferred_element_type=jnp.float32)
        wh = xw[:, :HD]                      # (N, H*D) projected node features
        el = xw[:, HD:HD + H]                # (N, H)   source/neighbour term
        er = xw[:, HD + H:HD + 2 * H]        # (N, H)   destination term

        # MXU head expansion (replaces per-head broadcast/concat loops):
        #   er_b[i, h*N + j] = er[i, h]
        er_b = jnp.dot(er, E, preferred_element_type=jnp.float32)        # (N,H*N)
        #   el_b[0, h*N + j] = el[j, h]  ("transpose" of el done on the MXU)
        el_expand = jnp.dot(el, E, preferred_element_type=jnp.float32)   # (N,H*N)
        el_b = jnp.dot(ones_row, el_expand * diag_sel,
                       preferred_element_type=jnp.float32)               # (1,H*N)

        # additive attention + LeakyReLU(0.2), masked to existing edges j -> i
        s = er_b + el_b                                                  # (N,H*N)
        s = jnp.where(s > 0, s, negative_slope * s)
        s = jnp.where(edge_mask, s, neg_big)

        # ONE full-row max (per-row constant cancels inside each head's
        # softmax; see header note on the underflow caveat).
        m = jnp.max(s, axis=-1, keepdims=True)                           # (N, 1)
        p = jnp.exp(s - m)
        p = jnp.where(edge_mask, p, 0.0)

        # per-head denominator via ONE MXU matmul, ONE EUP reciprocal,
        # ONE MXU expansion; guard zero-in-degree rows (self-loops normally
        # guarantee denom > 0, but don't rely on it).
        denom = jnp.dot(p, ET, preferred_element_type=jnp.float32)       # (N, H)
        inv = pl.reciprocal(jnp.maximum(denom, tiny), approx=True)       # (N, H)
        inv_b = jnp.dot(inv, E, preferred_element_type=jnp.float32)      # (N,H*N)
        attn = p * inv_b                                                 # (N,H*N)

        # aggregate every head with one MXU matmul against block-diagonal wh;
        # the block-diagonal slab is itself built on the MXU (no sublane
        # concat) and the result lands directly in concatenated-heads layout.
        block_wh = jnp.dot(rep_sel, wh,
                           preferred_element_type=jnp.float32) * head_block
        out = jnp.dot(attn, block_wh,
                      preferred_element_type=jnp.float32)                # (N,H*D)

        if apply_ln:  # NormalizeGNN('Layer', affine=False)
            mu = jnp.mean(out, axis=-1, keepdims=True)
            var = jnp.mean(jnp.square(out - mu), axis=-1, keepdims=True)
            out = (out - mu) * jax.lax.rsqrt(var + ln_eps)
        # LocalActivation('relu'); Dropout(p=0) == identity
        return jnp.maximum(out, 0.0)

    # node_encoder -> activation (-> dropout == identity)
    h = gat_layer(x_ref[...], w_refs[0][...], apply_ln=False)
    # TODO(synk): efeat is None, so EdgeEncoder / econv branch is unused.
    # conv -> LayerNorm -> activation per hidden layer
    for layer in range(num_layer):
        h = gat_layer(h, w_refs[1 + layer][...], apply_ln=True)
        # TODO(synk): args.skip_type='None' -> SkipConnectionLayer not applied.
    # NodePredict: Linear(H*D -> output_dim) with bias
    out_ref[...] = (jnp.dot(h, wp_ref[...], preferred_element_type=jnp.float32)
                    + bp_ref[...])


# ------------------------- parameter preprocessing --------------------------

def _fold_attention_weights(w, attn_l, attn_r, num_heads, head_dim):
    """W_aug = [W | W_el | W_er]: el/er become 2*H extra matmul output columns."""
    f_in = w.shape[0]
    w3 = w.reshape(f_in, num_heads, head_dim)
    w_el = jnp.einsum("fhd,hd->fh", w3, attn_l)   # el = x @ w_el  (source term)
    w_er = jnp.einsum("fhd,hd->fh", w3, attn_r)   # er = x @ w_er  (dest term)
    return jnp.concatenate([w, w_el, w_er], axis=1)     # (F, H*D + 2H)


def fold_params(params, *, num_heads, embed_dim):
    """One-time parameter preprocessing (outside the per-step forward)."""
    return {
        "w0": _fold_attention_weights(params["w0"], params["al0"], params["ar0"],
                                      num_heads, embed_dim),
        "layers": [_fold_attention_weights(p["w"], p["al"], p["ar"],
                                           num_heads, embed_dim)
                   for p in params["layers"]],
        "wp": params["wp"],
        "bp": params["bp"].reshape(1, -1),
    }


def _constant_inputs(adj, num_heads, head_dim):
    """Host-side loop-invariant layout plumbing (passed as kernel inputs)."""
    n = adj.shape[0]
    hn = num_heads * n
    hd = num_heads * head_dim
    # adj tiled per head along lanes: adj_t[i, h*n + j] = adj[i, j]
    adj_t = jnp.tile(adj.astype(jnp.float32), (1, num_heads))          # (n, hn)
    # diag_sel[j, h*n + j'] = 1.0 iff j == j'
    col = jnp.arange(hn) % n
    diag_sel = (jnp.arange(n)[:, None] == col[None, :]).astype(jnp.float32)
    rep_sel = diag_sel.T                                               # (hn, n)
    # head_block[h*n + j, h'*head_dim + d] = 1.0 iff h == h'
    row_h = jnp.arange(hn)[:, None] // n
    col_h = jnp.arange(hd)[None, :] // head_dim
    head_block = (row_h == col_h).astype(jnp.float32)
    # head-expansion matrix: E[h, h'*n + j] = 1.0 iff h == h'
    e = (jnp.arange(num_heads)[:, None] == (jnp.arange(hn)[None, :] // n)
         ).astype(jnp.float32)                                         # (H, hn)
    et = e.T                                                           # (hn, H)
    return adj_t, diag_sel, rep_sel, head_block, e, et


# --------------------------------- forward ----------------------------------

def gat_node_forward(adj, nfeat, folded, *, num_layer, num_heads, embed_dim):
    n = nfeat.shape[0]
    out_dim = folded["wp"].shape[1]
    adj_t, diag_sel, rep_sel, head_block, e, et = _constant_inputs(
        adj, num_heads, embed_dim)

    inputs = [adj_t, diag_sel, rep_sel, head_block, e, et,
              nfeat.astype(jnp.float32), folded["w0"], *folded["layers"],
              folded["wp"], folded["bp"]]

    # VMEM budget: everything stays resident in VMEM. The resident score /
    # probability tensors grow as ~4*H*N^2 bytes, so keep well below the
    # smallest scoped VMEM (v5e default 16 MiB scoped; v7x 64 MiB physical /
    # 32 MiB default scoped). If N grows past ~1k, tile the attention over
    # source-node blocks (online softmax) and set vmem_limit_bytes explicitly.
    total_bytes = sum(x.size * x.dtype.itemsize for x in inputs)
    total_bytes += 4 * n * (4 * num_heads * n + 3 * num_heads * embed_dim)
    assert total_bytes < 12 * 1024 * 1024, (
        "footprint no longer fits comfortably in VMEM; tile the attention and "
        "raise vmem_limit_bytes")

    kernel = functools.partial(
        _gat_node_fused_kernel, num_layer=num_layer, num_heads=num_heads,
        head_dim=embed_dim, negative_slope=0.2, ln_eps=1e-5)

    return pl.pallas_call(
        kernel,
        out_shape=jax.ShapeDtypeStruct((n, out_dim), jnp.float32),
    )(*inputs)


# -------------------------- deterministic params ----------------------------

def init_params(key, input_dim, embed_dim, num_heads, output_dim, num_layer):
    hdim = embed_dim * num_heads
    keys = jax.random.split(key, 5 + 3 * num_layer)
    s = 0.1
    params = {
        "w0": s * jax.random.normal(keys[0], (input_dim, hdim), jnp.float32),
        "al0": s * jax.random.normal(keys[1], (num_heads, embed_dim), jnp.float32),
        "ar0": s * jax.random.normal(keys[2], (num_heads, embed_dim), jnp.float32),
        "wp": s * jax.random.normal(keys[3], (hdim, output_dim), jnp.float32),
        "bp": s * jax.random.normal(keys[4], (output_dim,), jnp.float32),
        "layers": [],
    }
    for l in range(num_layer):
        k0, k1, k2 = keys[5 + 3 * l: 8 + 3 * l]
        params["layers"].append({
            "w": s * jax.random.normal(k0, (hdim, hdim), jnp.float32),
            "al": s * jax.random.normal(k1, (num_heads, embed_dim), jnp.float32),
            "ar": s * jax.random.normal(k2, (num_heads, embed_dim), jnp.float32),
        })
    return params


# ----------------------------------- main ------------------------------------

if __name__ == "__main__":
    N = 16            # number of nodes   (N * NUM_HEADS = 128 lanes, lane-dense)
    INPUT_DIM = 16
    EMBED_DIM = 8
    NUM_HEADS = 8     # hidden width = EMBED_DIM * NUM_HEADS = 64
    OUTPUT_DIM = 4
    NUM_LAYER = 2

    key = jax.random.PRNGKey(0)
    k_adj, k_feat, k_par = jax.random.split(key, 3)

    # dense adjacency: symmetric random graph with self-loops
    adj = (jax.random.uniform(k_adj, (N, N)) < 0.3).astype(jnp.float32)
    adj = jnp.maximum(adj, adj.T)
    adj = jnp.maximum(adj, jnp.eye(N, dtype=jnp.float32))

    nfeat = jax.random.normal(k_feat, (N, INPUT_DIM), jnp.float32)

    params = init_params(k_par, INPUT_DIM, EMBED_DIM, NUM_HEADS,
                         OUTPUT_DIM, NUM_LAYER)
    folded = fold_params(params, num_heads=NUM_HEADS, embed_dim=EMBED_DIM)

    fwd = jax.jit(functools.partial(gat_node_forward, num_layer=NUM_LAYER,
                                    num_heads=NUM_HEADS, embed_dim=EMBED_DIM))
    out = fwd(adj, nfeat, folded)
    out = jax.block_until_ready(out)
    assert out.shape == (N, OUTPUT_DIM)
    assert jnp.all(jnp.isfinite(out))
    print("KERNEL_OK")
</pallas_src>

<mosaic_0001>
module attributes {stable_mosaic.version = 11 : i64} {
  func.func @_gat_node_fused_kernel(%arg0: memref<16x128xf32, #tpu.memory_space<vmem>>, %arg1: memref<16x128xf32, #tpu.memory_space<vmem>>, %arg2: memref<128x16xf32, #tpu.memory_space<vmem>>, %arg3: memref<128x64xf32, #tpu.memory_space<vmem>>, %arg4: memref<8x128xf32, #tpu.memory_space<vmem>>, %arg5: memref<128x8xf32, #tpu.memory_space<vmem>>, %arg6: memref<16x16xf32, #tpu.memory_space<vmem>>, %arg7: memref<16x80xf32, #tpu.memory_space<vmem>>, %arg8: memref<64x80xf32, #tpu.memory_space<vmem>>, %arg9: memref<64x80xf32, #tpu.memory_space<vmem>>, %arg10: memref<64x4xf32, #tpu.memory_space<vmem>>, %arg11: memref<1x4xf32, #tpu.memory_space<vmem>>, %arg12: memref<16x4xf32, #tpu.memory_space<vmem>>) attributes {dimension_semantics = [], scalar_prefetch = 0 : i64, scratch_operands = 0 : i64, tpu.core_type = #tpu.core_type<tc>} {
    %c0 = arith.constant 0 : index
    %c0_0 = arith.constant 0 : index
    %0 = vector.load %arg0[%c0, %c0_0] : memref<16x128xf32, #tpu.memory_space<vmem>>, vector<16x128xf32>
    %cst = arith.constant 0.000000e+00 : f32
    %1 = vector.broadcast %cst : f32 to vector<16x128xf32>
    %2 = arith.cmpf ogt, %0, %1 : vector<16x128xf32>
    %c0_1 = arith.constant 0 : index
    %c0_2 = arith.constant 0 : index
    %3 = vector.load %arg1[%c0_1, %c0_2] : memref<16x128xf32, #tpu.memory_space<vmem>>, vector<16x128xf32>
    %c0_3 = arith.constant 0 : index
    %c0_4 = arith.constant 0 : index
    %4 = vector.load %arg2[%c0_3, %c0_4] : memref<128x16xf32, #tpu.memory_space<vmem>>, vector<128x16xf32>
    %c0_5 = arith.constant 0 : index
    %c0_6 = arith.constant 0 : index
    %5 = vector.load %arg3[%c0_5, %c0_6] : memref<128x64xf32, #tpu.memory_space<vmem>>, vector<128x64xf32>
    %c0_7 = arith.constant 0 : index
    %c0_8 = arith.constant 0 : index
    %6 = vector.load %arg4[%c0_7, %c0_8] : memref<8x128xf32, #tpu.memory_space<vmem>>, vector<8x128xf32>
    %c0_9 = arith.constant 0 : index
    %c0_10 = arith.constant 0 : index
    %7 = vector.load %arg5[%c0_9, %c0_10] : memref<128x8xf32, #tpu.memory_space<vmem>>, vector<128x8xf32>
    %cst_11 = arith.constant 1.000000e+00 : f32
    %8 = vector.broadcast %cst_11 : f32 to vector<1x16xf32>
    %c0_12 = arith.constant 0 : index
    %c0_13 = arith.constant 0 : index
    %9 = vector.load %arg6[%c0_12, %c0_13] : memref<16x16xf32, #tpu.memory_space<vmem>>, vector<16x16xf32>
    %c0_14 = arith.constant 0 : index
    %c0_15 = arith.constant 0 : index
    %10 = vector.load %arg7[%c0_14, %c0_15] : memref<16x80xf32, #tpu.memory_space<vmem>>, vector<16x80xf32>
    %cst_16 = arith.constant dense<0.000000e+00> : vector<16x80xf32>
    %11 = tpu.matmul %9, %10, %cst_16 {dimension_numbers = #tpu.dot_dimension_numbers<[1], [0], [0], [1], [0, 0, 1, 1], [], []>} : vector<16x16xf32>, vector<16x80xf32>, vector<16x80xf32> -> vector<16x80xf32>
    %12 = vector.extract_strided_slice %11 {offsets = [0, 0], sizes = [16, 64], strides = [1, 1]} : vector<16x80xf32> to vector<16x64xf32>
    %13 = vector.extract_strided_slice %11 {offsets = [0, 64], sizes = [16, 8], strides = [1, 1]} : vector<16x80xf32> to vector<16x8xf32>
    %14 = vector.extract_strided_slice %11 {offsets = [0, 72], sizes = [16, 8], strides = [1, 1]} : vector<16x80xf32> to vector<16x8xf32>
    %cst_17 = arith.constant dense<0.000000e+00> : vector<16x128xf32>
    %15 = tpu.matmul %14, %6, %cst_17 {dimension_numbers = #tpu.dot_dimension_numbers<[1], [0], [0], [1], [0, 0, 1, 1], [], []>} : vector<16x8xf32>, vector<8x128xf32>, vector<16x128xf32> -> vector<16x128xf32>
    %cst_18 = arith.constant dense<0.000000e+00> : vector<16x128xf32>
    %16 = tpu.matmul %13, %6, %cst_18 {dimension_numbers = #tpu.dot_dimension_numbers<[1], [0], [0], [1], [0, 0, 1, 1], [], []>} : vector<16x8xf32>, vector<8x128xf32>, vector<16x128xf32> -> vector<16x128xf32>
    %17 = arith.mulf %16, %3 : vector<16x128xf32>
    %cst_19 = arith.constant dense<0.000000e+00> : vector<1x128xf32>
    %18 = tpu.matmul %8, %17, %cst_19 {dimension_numbers = #tpu.dot_dimension_numbers<[1], [0], [0], [1], [0, 0, 1, 1], [], []>} : vector<1x16xf32>, vector<16x128xf32>, vector<1x128xf32> -> vector<1x128xf32>
    %19 = vector.broadcast %18 : vector<1x128xf32> to vector<16x128xf32>
    %20 = arith.addf %15, %19 : vector<16x128xf32>
    %cst_20 = arith.constant 0.000000e+00 : f32
    %21 = vector.broadcast %cst_20 : f32 to vector<16x128xf32>
    %22 = arith.cmpf ogt, %20, %21 : vector<16x128xf32>
    %cst_21 = arith.constant 2.000000e-01 : f32
    %23 = vector.broadcast %cst_21 : f32 to vector<16x128xf32>
    %24 = arith.mulf %23, %20 : vector<16x128xf32>
    %25 = arith.select %22, %20, %24 : vector<16x128xi1>, vector<16x128xf32>
    %cst_22 = arith.constant -1.000000e+30 : f32
    %26 = vector.broadcast %cst_22 : f32 to vector<16x128xf32>
    %27 = arith.select %2, %25, %26 : vector<16x128xi1>, vector<16x128xf32>
    %cst_23 = arith.constant dense<0xFF800000> : vector<16xf32>
    %28 = vector.multi_reduction <maximumf>, %27, %cst_23 [1] : vector<16x128xf32> to vector<16xf32>
    %29 = vector.shape_cast %28 : vector<16xf32> to vector<16x1xf32>
    %30 = vector.broadcast %29 : vector<16x1xf32> to vector<16x128xf32>
    %31 = arith.subf %27, %30 : vector<16x128xf32>
    %32 = math.exp %31 : vector<16x128xf32>
    %cst_24 = arith.constant 0.000000e+00 : f32
    %33 = vector.broadcast %cst_24 : f32 to vector<16x128xf32>
    %34 = arith.select %2, %32, %33 : vector<16x128xi1>, vector<16x128xf32>
    %cst_25 = arith.constant dense<0.000000e+00> : vector<16x8xf32>
    %35 = tpu.matmul %34, %7, %cst_25 {dimension_numbers = #tpu.dot_dimension_numbers<[1], [0], [0], [1], [0, 0, 1, 1], [], []>} : vector<16x128xf32>, vector<128x8xf32>, vector<16x8xf32> -> vector<16x8xf32>
    %cst_26 = arith.constant 9.99999968E-21 : f32
    %36 = vector.broadcast %cst_26 : f32 to vector<16x8xf32>
    %37 = arith.maximumf %35, %36 : vector<16x8xf32>
    %38 = tpu.reciprocal %37 {approx = true} : vector<16x8xf32> -> vector<16x8xf32>
    %cst_27 = arith.constant dense<0.000000e+00> : vector<16x128xf32>
    %39 = tpu.matmul %38, %6, %cst_27 {dimension_numbers = #tpu.dot_dimension_numbers<[1], [0], [0], [1], [0, 0, 1, 1], [], []>} : vector<16x8xf32>, vector<8x128xf32>, vector<16x128xf32> -> vector<16x128xf32>
    %40 = arith.mulf %34, %39 : vector<16x128xf32>
    %cst_28 = arith.constant dense<0.000000e+00> : vector<128x64xf32>
    %41 = tpu.matmul %4, %12, %cst_28 {dimension_numbers = #tpu.dot_dimension_numbers<[1], [0], [0], [1], [0, 0, 1, 1], [], []>} : vector<128x16xf32>, vector<16x64xf32>, vector<128x64xf32> -> vector<128x64xf32>
    %42 = arith.mulf %41, %5 : vector<128x64xf32>
    %cst_29 = arith.constant dense<0.000000e+00> : vector<16x64xf32>
    %43 = tpu.matmul %40, %42, %cst_29 {dimension_numbers = #tpu.dot_dimension_numbers<[1], [0], [0], [1], [0, 0, 1, 1], [], []>} : vector<16x128xf32>, vector<128x64xf32>, vector<16x64xf32> -> vector<16x64xf32>
    %cst_30 = arith.constant 0.000000e+00 : f32
    %44 = vector.broadcast %cst_30 : f32 to vector<16x64xf32>
    %45 = arith.maximumf %43, %44 : vector<16x64xf32>
    %c0_31 = arith.constant 0 : index
    %c0_32 = arith.constant 0 : index
    %46 = vector.load %arg8[%c0_31, %c0_32] : memref<64x80xf32, #tpu.memory_space<vmem>>, vector<64x80xf32>
    %cst_33 = arith.constant dense<0.000000e+00> : vector<16x80xf32>
    %47 = tpu.matmul %45, %46, %cst_33 {dimension_numbers = #tpu.dot_dimension_numbers<[1], [0], [0], [1], [0, 0, 1, 1], [], []>} : vector<16x64xf32>, vector<64x80xf32>, vector<16x80xf32> -> vector<16x80xf32>
    %48 = vector.extract_strided_slice %47 {offsets = [0, 0], sizes = [16, 64], strides = [1, 1]} : vector<16x80xf32> to vector<16x64xf32>
    %49 = vector.extract_strided_slice %47 {offsets = [0, 64], sizes = [16, 8], strides = [1, 1]} : vector<16x80xf32> to vector<16x8xf32>
    %50 = vector.extract_strided_slice %47 {offsets = [0, 72], sizes = [16, 8], strides = [1, 1]} : vector<16x80xf32> to vector<16x8xf32>
    %cst_34 = arith.constant dense<0.000000e+00> : vector<16x128xf32>
    %51 = tpu.matmul %50, %6, %cst_34 {dimension_numbers = #tpu.dot_dimension_numbers<[1], [0], [0], [1], [0, 0, 1, 1], [], []>} : vector<16x8xf32>, vector<8x128xf32>, vector<16x128xf32> -> vector<16x128xf32>
    %cst_35 = arith.constant dense<0.000000e+00> : vector<16x128xf32>
    %52 = tpu.matmul %49, %6, %cst_35 {dimension_numbers = #tpu.dot_dimension_numbers<[1], [0], [0], [1], [0, 0, 1, 1], [], []>} : vector<16x8xf32>, vector<8x128xf32>, vector<16x128xf32> -> vector<16x128xf32>
    %53 = arith.mulf %52, %3 : vector<16x128xf32>
    %cst_36 = arith.constant dense<0.000000e+00> : vector<1x128xf32>
    %54 = tpu.matmul %8, %53, %cst_36 {dimension_numbers = #tpu.dot_dimension_numbers<[1], [0], [0], [1], [0, 0, 1, 1], [], []>} : vector<1x16xf32>, vector<16x128xf32>, vector<1x128xf32> -> vector<1x128xf32>
    %55 = vector.broadcast %54 : vector<1x128xf32> to vector<16x128xf32>
    %56 = arith.addf %51, %55 : vector<16x128xf32>
    %cst_37 = arith.constant 0.000000e+00 : f32
    %57 = vector.broadcast %cst_37 : f32 to vector<16x128xf32>
    %58 = arith.cmpf ogt, %56, %57 : vector<16x128xf32>
    %cst_38 = arith.constant 2.000000e-01 : f32
    %59 = vector.broadcast %cst_38 : f32 to vector<16x128xf32>
    %60 = arith.mulf %59, %56 : vector<16x128xf32>
    %61 = arith.select %58, %56, %60 : vector<16x128xi1>, vector<16x128xf32>
    %cst_39 = arith.constant -1.000000e+30 : f32
    %62 = vector.broadcast %cst_39 : f32 to vector<16x128xf32>
    %63 = arith.select %2, %61, %62 : vector<16x128xi1>, vector<16x128xf32>
    %cst_40 = arith.constant dense<0xFF800000> : vector<16xf32>
    %64 = vector.multi_reduction <maximumf>, %63, %cst_40 [1] : vector<16x128xf32> to vector<16xf32>
    %65 = vector.shape_cast %64 : vector<16xf32> to vector<16x1xf32>
    %66 = vector.broadcast %65 : vector<16x1xf32> to vector<16x128xf32>
    %67 = arith.subf %63, %66 : vector<16x128xf32>
    %68 = math.exp %67 : vector<16x128xf32>
    %cst_41 = arith.constant 0.000000e+00 : f32
    %69 = vector.broadcast %cst_41 : f32 to vector<16x128xf32>
    %70 = arith.select %2, %68, %69 : vector<16x128xi1>, vector<16x128xf32>
    %cst_42 = arith.constant dense<0.000000e+00> : vector<16x8xf32>
    %71 = tpu.matmul %70, %7, %cst_42 {dimension_numbers = #tpu.dot_dimension_numbers<[1], [0], [0], [1], [0, 0, 1, 1], [], []>} : vector<16x128xf32>, vector<128x8xf32>, vector<16x8xf32> -> vector<16x8xf32>
    %cst_43 = arith.constant 9.99999968E-21 : f32
    %72 = vector.broadcast %cst_43 : f32 to vector<16x8xf32>
    %73 = arith.maximumf %71, %72 : vector<16x8xf32>
    %74 = tpu.reciprocal %73 {approx = true} : vector<16x8xf32> -> vector<16x8xf32>
    %cst_44 = arith.constant dense<0.000000e+00> : vector<16x128xf32>
    %75 = tpu.matmul %74, %6, %cst_44 {dimension_numbers = #tpu.dot_dimension_numbers<[1], [0], [0], [1], [0, 0, 1, 1], [], []>} : vector<16x8xf32>, vector<8x128xf32>, vector<16x128xf32> -> vector<16x128xf32>
    %76 = arith.mulf %70, %75 : vector<16x128xf32>
    %cst_45 = arith.constant dense<0.000000e+00> : vector<128x64xf32>
    %77 = tpu.matmul %4, %48, %cst_45 {dimension_numbers = #tpu.dot_dimension_numbers<[1], [0], [0], [1], [0, 0, 1, 1], [], []>} : vector<128x16xf32>, vector<16x64xf32>, vector<128x64xf32> -> vector<128x64xf32>
    %78 = arith.mulf %77, %5 : vector<128x64xf32>
    %cst_46 = arith.constant dense<0.000000e+00> : vector<16x64xf32>
    %79 = tpu.matmul %76, %78, %cst_46 {dimension_numbers = #tpu.dot_dimension_numbers<[1], [0], [0], [1], [0, 0, 1, 1], [], []>} : vector<16x128xf32>, vector<128x64xf32>, vector<16x64xf32> -> vector<16x64xf32>
    %cst_47 = arith.constant dense<0.000000e+00> : vector<16xf32>
    %80 = vector.multi_reduction <add>, %79, %cst_47 [1] : vector<16x64xf32> to vector<16xf32>
    %81 = vector.shape_cast %80 : vector<16xf32> to vector<16x1xf32>
    %cst_48 = arith.constant 6.400000e+01 : f32
    %82 = vector.broadcast %cst_48 : f32 to vector<16x1xf32>
    %83 = arith.divf %81, %82 : vector<16x1xf32>
    %84 = vector.broadcast %83 : vector<16x1xf32> to vector<16x64xf32>
    %85 = arith.subf %79, %84 : vector<16x64xf32>
    %86 = arith.mulf %85, %85 : vector<16x64xf32>
    %cst_49 = arith.constant dense<0.000000e+00> : vector<16xf32>
    %87 = vector.multi_reduction <add>, %86, %cst_49 [1] : vector<16x64xf32> to vector<16xf32>
    %88 = vector.shape_cast %87 : vector<16xf32> to vector<16x1xf32>
    %cst_50 = arith.constant 6.400000e+01 : f32
    %89 = vector.broadcast %cst_50 : f32 to vector<16x1xf32>
    %90 = arith.divf %88, %89 : vector<16x1xf32>
    %91 = vector.broadcast %83 : vector<16x1xf32> to vector<16x64xf32>
    %92 = arith.subf %79, %91 : vector<16x64xf32>
    %cst_51 = arith.constant 9.99999974E-6 : f32
    %93 = vector.broadcast %cst_51 : f32 to vector<16x1xf32>
    %94 = arith.addf %90, %93 : vector<16x1xf32>
    %95 = math.rsqrt %94 : vector<16x1xf32>
    %96 = vector.broadcast %95 : vector<16x1xf32> to vector<16x64xf32>
    %97 = arith.mulf %92, %96 : vector<16x64xf32>
    %cst_52 = arith.constant 0.000000e+00 : f32
    %98 = vector.broadcast %cst_52 : f32 to vector<16x64xf32>
    %99 = arith.maximumf %97, %98 : vector<16x64xf32>
    %c0_53 = arith.constant 0 : index
    %c0_54 = arith.constant 0 : index
    %100 = vector.load %arg9[%c0_53, %c0_54] : memref<64x80xf32, #tpu.memory_space<vmem>>, vector<64x80xf32>
    %cst_55 = arith.constant dense<0.000000e+00> : vector<16x80xf32>
    %101 = tpu.matmul %99, %100, %cst_55 {dimension_numbers = #tpu.dot_dimension_numbers<[1], [0], [0], [1], [0, 0, 1, 1], [], []>} : vector<16x64xf32>, vector<64x80xf32>, vector<16x80xf32> -> vector<16x80xf32>
    %102 = vector.extract_strided_slice %101 {offsets = [0, 0], sizes = [16, 64], strides = [1, 1]} : vector<16x80xf32> to vector<16x64xf32>
    %103 = vector.extract_strided_slice %101 {offsets = [0, 64], sizes = [16, 8], strides = [1, 1]} : vector<16x80xf32> to vector<16x8xf32>
    %104 = vector.extract_strided_slice %101 {offsets = [0, 72], sizes = [16, 8], strides = [1, 1]} : vector<16x80xf32> to vector<16x8xf32>
    %cst_56 = arith.constant dense<0.000000e+00> : vector<16x128xf32>
    %105 = tpu.matmul %104, %6, %cst_56 {dimension_numbers = #tpu.dot_dimension_numbers<[1], [0], [0], [1], [0, 0, 1, 1], [], []>} : vector<16x8xf32>, vector<8x128xf32>, vector<16x128xf32> -> vector<16x128xf32>
    %cst_57 = arith.constant dense<0.000000e+00> : vector<16x128xf32>
    %106 = tpu.matmul %103, %6, %cst_57 {dimension_numbers = #tpu.dot_dimension_numbers<[1], [0], [0], [1], [0, 0, 1, 1], [], []>} : vector<16x8xf32>, vector<8x128xf32>, vector<16x128xf32> -> vector<16x128xf32>
    %107 = arith.mulf %106, %3 : vector<16x128xf32>
    %cst_58 = arith.constant dense<0.000000e+00> : vector<1x128xf32>
    %108 = tpu.matmul %8, %107, %cst_58 {dimension_numbers = #tpu.dot_dimension_numbers<[1], [0], [0], [1], [0, 0, 1, 1], [], []>} : vector<1x16xf32>, vector<16x128xf32>, vector<1x128xf32> -> vector<1x128xf32>
    %109 = vector.broadcast %108 : vector<1x128xf32> to vector<16x128xf32>
    %110 = arith.addf %105, %109 : vector<16x128xf32>
    %cst_59 = arith.constant 0.000000e+00 : f32
    %111 = vector.broadcast %cst_59 : f32 to vector<16x128xf32>
    %112 = arith.cmpf ogt, %110, %111 : vector<16x128xf32>
    %cst_60 = arith.constant 2.000000e-01 : f32
    %113 = vector.broadcast %cst_60 : f32 to vector<16x128xf32>
    %114 = arith.mulf %113, %110 : vector<16x128xf32>
    %115 = arith.select %112, %110, %114 : vector<16x128xi1>, vector<16x128xf32>
    %cst_61 = arith.constant -1.000000e+30 : f32
    %116 = vector.broadcast %cst_61 : f32 to vector<16x128xf32>
    %117 = arith.select %2, %115, %116 : vector<16x128xi1>, vector<16x128xf32>
    %cst_62 = arith.constant dense<0xFF800000> : vector<16xf32>
    %118 = vector.multi_reduction <maximumf>, %117, %cst_62 [1] : vector<16x128xf32> to vector<16xf32>
    %119 = vector.shape_cast %118 : vector<16xf32> to vector<16x1xf32>
    %120 = vector.broadcast %119 : vector<16x1xf32> to vector<16x128xf32>
    %121 = arith.subf %117, %120 : vector<16x128xf32>
    %122 = math.exp %121 : vector<16x128xf32>
    %cst_63 = arith.constant 0.000000e+00 : f32
    %123 = vector.broadcast %cst_63 : f32 to vector<16x128xf32>
    %124 = arith.select %2, %122, %123 : vector<16x128xi1>, vector<16x128xf32>
    %cst_64 = arith.constant dense<0.000000e+00> : vector<16x8xf32>
    %125 = tpu.matmul %124, %7, %cst_64 {dimension_numbers = #tpu.dot_dimension_numbers<[1], [0], [0], [1], [0, 0, 1, 1], [], []>} : vector<16x128xf32>, vector<128x8xf32>, vector<16x8xf32> -> vector<16x8xf32>
    %cst_65 = arith.constant 9.99999968E-21 : f32
    %126 = vector.broadcast %cst_65 : f32 to vector<16x8xf32>
    %127 = arith.maximumf %125, %126 : vector<16x8xf32>
    %128 = tpu.reciprocal %127 {approx = true} : vector<16x8xf32> -> vector<16x8xf32>
    %cst_66 = arith.constant dense<0.000000e+00> : vector<16x128xf32>
    %129 = tpu.matmul %128, %6, %cst_66 {dimension_numbers = #tpu.dot_dimension_numbers<[1], [0], [0], [1], [0, 0, 1, 1], [], []>} : vector<16x8xf32>, vector<8x128xf32>, vector<16x128xf32> -> vector<16x128xf32>
    %130 = arith.mulf %124, %129 : vector<16x128xf32>
    %cst_67 = arith.constant dense<0.000000e+00> : vector<128x64xf32>
    %131 = tpu.matmul %4, %102, %cst_67 {dimension_numbers = #tpu.dot_dimension_numbers<[1], [0], [0], [1], [0, 0, 1, 1], [], []>} : vector<128x16xf32>, vector<16x64xf32>, vector<128x64xf32> -> vector<128x64xf32>
    %132 = arith.mulf %131, %5 : vector<128x64xf32>
    %cst_68 = arith.constant dense<0.000000e+00> : vector<16x64xf32>
    %133 = tpu.matmul %130, %132, %cst_68 {dimension_numbers = #tpu.dot_dimension_numbers<[1], [0], [0], [1], [0, 0, 1, 1], [], []>} : vector<16x128xf32>, vector<128x64xf32>, vector<16x64xf32> -> vector<16x64xf32>
    %cst_69 = arith.constant dense<0.000000e+00> : vector<16xf32>
    %134 = vector.multi_reduction <add>, %133, %cst_69 [1] : vector<16x64xf32> to vector<16xf32>
    %135 = vector.shape_cast %134 : vector<16xf32> to vector<16x1xf32>
    %cst_70 = arith.constant 6.400000e+01 : f32
    %136 = vector.broadcast %cst_70 : f32 to vector<16x1xf32>
    %137 = arith.divf %135, %136 : vector<16x1xf32>
    %138 = vector.broadcast %137 : vector<16x1xf32> to vector<16x64xf32>
    %139 = arith.subf %133, %138 : vector<16x64xf32>
    %140 = arith.mulf %139, %139 : vector<16x64xf32>
    %cst_71 = arith.constant dense<0.000000e+00> : vector<16xf32>
    %141 = vector.multi_reduction <add>, %140, %cst_71 [1] : vector<16x64xf32> to vector<16xf32>
    %142 = vector.shape_cast %141 : vector<16xf32> to vector<16x1xf32>
    %cst_72 = arith.constant 6.400000e+01 : f32
    %143 = vector.broadcast %cst_72 : f32 to vector<16x1xf32>
    %144 = arith.divf %142, %143 : vector<16x1xf32>
    %145 = vector.broadcast %137 : vector<16x1xf32> to vector<16x64xf32>
    %146 = arith.subf %133, %145 : vector<16x64xf32>
    %cst_73 = arith.constant 9.99999974E-6 : f32
    %147 = vector.broadcast %cst_73 : f32 to vector<16x1xf32>
    %148 = arith.addf %144, %147 : vector<16x1xf32>
    %149 = math.rsqrt %148 : vector<16x1xf32>
    %150 = vector.broadcast %149 : vector<16x1xf32> to vector<16x64xf32>
    %151 = arith.mulf %146, %150 : vector<16x64xf32>
    %cst_74 = arith.constant 0.000000e+00 : f32
    %152 = vector.broadcast %cst_74 : f32 to vector<16x64xf32>
    %153 = arith.maximumf %151, %152 : vector<16x64xf32>
    %c0_75 = arith.constant 0 : index
    %c0_76 = arith.constant 0 : index
    %154 = vector.load %arg10[%c0_75, %c0_76] : memref<64x4xf32, #tpu.memory_space<vmem>>, vector<64x4xf32>
    %cst_77 = arith.constant dense<0.000000e+00> : vector<16x4xf32>
    %155 = tpu.matmul %153, %154, %cst_77 {dimension_numbers = #tpu.dot_dimension_numbers<[1], [0], [0], [1], [0, 0, 1, 1], [], []>} : vector<16x64xf32>, vector<64x4xf32>, vector<16x4xf32> -> vector<16x4xf32>
    %c0_78 = arith.constant 0 : index
    %c0_79 = arith.constant 0 : index
    %156 = vector.load %arg11[%c0_78, %c0_79] : memref<1x4xf32, #tpu.memory_space<vmem>>, vector<1x4xf32>
    %157 = vector.broadcast %156 : vector<1x4xf32> to vector<16x4xf32>
    %158 = arith.addf %155, %157 : vector<16x4xf32>
    %c0_80 = arith.constant 0 : index
    %c0_81 = arith.constant 0 : index
    %159 = vector.load %arg12[%c0_80, %c0_81] : memref<16x4xf32, #tpu.memory_space<vmem>>, vector<16x4xf32>
    tpu.vector_store %arg12[%c0_80, %c0_81], %158 {strides = array<i32>} : memref<16x4xf32, #tpu.memory_space<vmem>>, vector<16x4xf32>,
    return
  }
}

</mosaic_0001>

<llo_original>
// kernel: tile.9
$region0: #{tile.9}
  %s0 = inlined_call_operand.vmem [shape: f32[16,8,16], index: 0, kind: input, shape index: {}]
  %s1 = inlined_call_operand.vmem [shape: f32[16,128], index: 1, kind: output, shape index: {}]
  %v2 = vld [vmem:[%s0] ss:$8 sm:$0xf]
  %v3 = vld [vmem:[%s0] ss:$8 sm:$0xf0]
  %vm4 = vcmask 1047556
  %v5 = vsel %vm4, %v3, %v2
  %vm6 = vcmask 130048
  %7 = vst.msk [vmem:[%s1] sm:$0xff] %vm6, %v5
  %s8 = scalar_lea.vmem %s0, 64
  %v9 = vld [vmem:[%s8] ss:$8 sm:$0xf]
  %s10 = scalar_lea.vmem %s0, 64
  %v11 = vld [vmem:[%s10] ss:$8 sm:$0xf0]
  %vm12 = vcmask 1047556
  %v13 = vsel %vm12, %v11, %v9
  %vm14 = vcmask 130048
  %s15 = scalar_lea.vmem %s1, 8
  %16 = vst.msk [vmem:[%s15] sm:$0xff] %vm14, %v13
  %s17 = scalar_lea.vmem %s0, 7
  %v18 = vld [vmem:[%s17] ss:$8 sm:$0xf]
  %s19 = scalar_lea.vmem %s0, 7
  %v20 = vld [vmem:[%s19] ss:$8 sm:$0xf0]
  %vm21 = vcmask 1047556
  %v22 = vsel %vm21, %v20, %v18
  %23 = vrot.lane.b32.xlu0 %v22, 112
  %v24 = vpop.permute.xlu0 %23
  %vm25 = vcmask 1048448
  %26 = vst.msk [vmem:[%s1] sm:$0xff] %vm25, %v24
  %s27 = scalar_lea.vmem %s0, 71
  %v28 = vld [vmem:[%s27] ss:$8 sm:$0xf]
  %s29 = scalar_lea.vmem %s0, 71
  %v30 = vld [vmem:[%s29] ss:$8 sm:$0xf0]
  %vm31 = vcmask 1047556
  %v32 = vsel %vm31, %v30, %v28
  %33 = vrot.lane.b32.xlu0 %v32, 112
  %v34 = vpop.permute.xlu0 %33
  %vm35 = vcmask 1048448
  %s36 = scalar_lea.vmem %s1, 8
  %37 = vst.msk [vmem:[%s36] sm:$0xff] %vm35, %v34
  %s38 = scalar_lea.vmem %s0, 6
  %v39 = vld [vmem:[%s38] ss:$8 sm:$0xf]
  %s40 = scalar_lea.vmem %s0, 6
  %v41 = vld [vmem:[%s40] ss:$8 sm:$0xf0]
  %vm42 = vcmask 1047556
  %v43 = vsel %vm42, %v41, %v39
  %44 = vrot.lane.b32.xlu0 %v43, 96
  %v45 = vpop.permute.xlu0 %44
  %vm46 = vcmask 917248
  %47 = vst.msk [vmem:[%s1] sm:$0xff] %vm46, %v45
  %s48 = scalar_lea.vmem %s0, 70
  %v49 = vld [vmem:[%s48] ss:$8 sm:$0xf]
  %s50 = scalar_lea.vmem %s0, 70
  %v51 = vld [vmem:[%s50] ss:$8 sm:$0xf0]
  %vm52 = vcmask 1047556
  %v53 = vsel %vm52, %v51, %v49
  %54 = vrot.lane.b32.xlu0 %v53, 96
  %v55 = vpop.permute.xlu0 %54
  %vm56 = vcmask 917248
  %s57 = scalar_lea.vmem %s1, 8
  %58 = vst.msk [vmem:[%s57] sm:$0xff] %vm56, %v55
  %s59 = scalar_lea.vmem %s0, 5
  %v60 = vld [vmem:[%s59] ss:$8 sm:$0xf]
  %s61 = scalar_lea.vmem %s0, 5
  %v62 = vld [vmem:[%s61] ss:$8 sm:$0xf0]
  %vm63 = vcmask 1047556
  %v64 = vsel %vm63, %v62, %v60
  %65 = vrot.lane.b32.xlu0 %v64, 80
  %v66 = vpop.permute.xlu0 %65
  %vm67 = vcmask 786048
  %68 = vst.msk [vmem:[%s1] sm:$0xff] %vm67, %v66
  %s69 = scalar_lea.vmem %s0, 69
  %v70 = vld [vmem:[%s69] ss:$8 sm:$0xf]
  %s71 = scalar_lea.vmem %s0, 69
  %v72 = vld [vmem:[%s71] ss:$8 sm:$0xf0]
  %vm73 = vcmask 1047556
  %v74 = vsel %vm73, %v72, %v70
  %75 = vrot.lane.b32.xlu0 %v74, 80
  %v76 = vpop.permute.xlu0 %75
  %vm77 = vcmask 786048
  %s78 = scalar_lea.vmem %s1, 8
  %79 = vst.msk [vmem:[%s78] sm:$0xff] %vm77, %v76
  %s80 = scalar_lea.vmem %s0, 4
  %v81 = vld [vmem:[%s80] ss:$8 sm:$0xf]
  %s82 = scalar_lea.vmem %s0, 4
  %v83 = vld [vmem:[%s82] ss:$8 sm:$0xf0]
  %vm84 = vcmask 1047556
  %v85 = vsel %vm84, %v83, %v81
  %86 = vrot.lane.b32.xlu0 %v85, 64
  %v87 = vpop.permute.xlu0 %86
  %vm88 = vcmask 654848
  %89 = vst.msk [vmem:[%s1] sm:$0xff] %vm88, %v87
  %s90 = scalar_lea.vmem %s0, 68
  %v91 = vld [vmem:[%s90] ss:$8 sm:$0xf]
  %s92 = scalar_lea.vmem %s0, 68
  %v93 = vld [vmem:[%s92] ss:$8 sm:$0xf0]
  %vm94 = vcmask 1047556
  %v95 = vsel %vm94, %v93, %v91
  %96 = vrot.lane.b32.xlu0 %v95, 64
  %v97 = vpop.permute.xlu0 %96
  %vm98 = vcmask 654848
  %s99 = scalar_lea.vmem %s1, 8
  %100 = vst.msk [vmem:[%s99] sm:$0xff] %vm98, %v97
  %s101 = scalar_lea.vmem %s0, 3
  %v102 = vld [vmem:[%s101] ss:$8 sm:$0xf]
  %s103 = scalar_lea.vmem %s0, 3
  %v104 = vld [vmem:[%s103] ss:$8 sm:$0xf0]
  %vm105 = vcmask 1047556
  %v106 = vsel %vm105, %v104, %v102
  %107 = vrot.lane.b32.xlu0 %v106, 48
  %v108 = vpop.permute.xlu0 %107
  %vm109 = vcmask 523648
  %110 = vst.msk [vmem:[%s1] sm:$0xff] %vm109, %v108
  %s111 = scalar_lea.vmem %s0, 67
  %v112 = vld [vmem:[%s111] ss:$8 sm:$0xf]
  %s113 = scalar_lea.vmem %s0, 67
  %v114 = vld [vmem:[%s113] ss:$8 sm:$0xf0]
  %vm115 = vcmask 1047556
  %v116 = vsel %vm115, %v114, %v112
  %117 = vrot.lane.b32.xlu0 %v116, 48
  %v118 = vpop.permute.xlu0 %117
  %vm119 = vcmask 523648
  %s120 = scalar_lea.vmem %s1, 8
  %121 = vst.msk [vmem:[%s120] sm:$0xff] %vm119, %v118
  %s122 = scalar_lea.vmem %s0, 2
  %v123 = vld [vmem:[%s122] ss:$8 sm:$0xf]
  %s124 = scalar_lea.vmem %s0, 2
  %v125 = vld [vmem:[%s124] ss:$8 sm:$0xf0]
  %vm126 = vcmask 1047556
  %v127 = vsel %vm126, %v125, %v123
  %128 = vrot.lane.b32.xlu0 %v127, 32
  %v129 = vpop.permute.xlu0 %128
  %vm130 = vcmask 392448
  %131 = vst.msk [vmem:[%s1] sm:$0xff] %vm130, %v129
  %s132 = scalar_lea.vmem %s0, 66
  %v133 = vld [vmem:[%s132] ss:$8 sm:$0xf]
  %s134 = scalar_lea.vmem %s0, 66
  %v135 = vld [vmem:[%s134] ss:$8 sm:$0xf0]
  %vm136 = vcmask 1047556
  %v137 = vsel %vm136, %v135, %v133
  %138 = vrot.lane.b32.xlu0 %v137, 32
  %v139 = vpop.permute.xlu0 %138
  %vm140 = vcmask 392448
  %s141 = scalar_lea.vmem %s1, 8
  %142 = vst.msk [vmem:[%s141] sm:$0xff] %vm140, %v139
  %s143 = scalar_lea.vmem %s0, 1
  %v144 = vld [vmem:[%s143] ss:$8 sm:$0xf]
  %s145 = scalar_lea.vmem %s0, 1
  %v146 = vld [vmem:[%s145] ss:$8 sm:$0xf0]
  %vm147 = vcmask 1047556
  %v148 = vsel %vm147, %v146, %v144
  %149 = vrot.lane.b32.xlu0 %v148, 16
  %v150 = vpop.permute.xlu0 %149
  %vm151 = vcmask 261248
  %152 = vst.msk [vmem:[%s1] sm:$0xff] %vm151, %v150
  %s153 = scalar_lea.vmem %s0, 65
  %v154 = vld [vmem:[%s153] ss:$8 sm:$0xf]
  %s155 = scalar_lea.vmem %s0, 65
  %v156 = vld [vmem:[%s155] ss:$8 sm:$0xf0]
  %vm157 = vcmask 1047556
  %v158 = vsel %vm157, %v156, %v154
  %159 = vrot.lane.b32.xlu0 %v158, 16
  %v160 = vpop.permute.xlu0 %159
  %vm161 = vcmask 261248
  %s162 = scalar_lea.vmem %s1, 8
  %163 = vst.msk [vmem:[%s162] sm:$0xff] %vm161, %v160

// kernel: gat_node_forward.1
$region0: #{gat_node_forward.1}
  #allocation0 [shape = 'u32[]', space=smem, size = 0x4, offset = 0x4, fixed_abs, tag = 'smem constant byte address 0x4 - core index']
  #allocation1 [shape = 'u32[144,128]{1,0:T(1,128)}', space=vmem, size = 0x12000, scoped, tag = 'internal scratch']
  %s0 = inlined_call_operand.vmem [shape: f32[16,128], index: 0, kind: input, shape index: {}]
  %s1 = inlined_call_operand.vmem [shape: f32[16,128], index: 1, kind: input, shape index: {}]
  %s2 = inlined_call_operand.vmem [shape: f32[128,16], index: 2, kind: input, shape index: {}]
  %s3 = inlined_call_operand.vmem [shape: f32[128,64], index: 3, kind: input, shape index: {}]
  %s4 = inlined_call_operand.vmem [shape: f32[8,128], index: 4, kind: input, shape index: {}]
  %s5 = inlined_call_operand.vmem [shape: f32[128,8], index: 5, kind: input, shape index: {}]
  %s6 = inlined_call_operand.vmem [shape: f32[16,16], index: 6, kind: input, shape index: {}]
  %s7 = inlined_call_operand.vmem [shape: f32[16,80], index: 7, kind: input, shape index: {}]
  %s8 = inlined_call_operand.vmem [shape: f32[64,80], index: 8, kind: input, shape index: {}]
  %s9 = inlined_call_operand.vmem [shape: f32[64,80], index: 9, kind: input, shape index: {}]
  %s10 = inlined_call_operand.vmem [shape: f32[64,4], index: 10, kind: input, shape index: {}]
  %s11 = inlined_call_operand.vmem [shape: f32[1,4], index: 11, kind: input, shape index: {}]
  %s12 = inlined_call_operand.vmem [shape: f32[16,4], index: 12, kind: output, shape index: {}]
  %s13 = sld [smem:[#allocation0]]
  $region58: #{gat_node_forward.1} parent=0
    _
  %s15 = ssub.s32 1, %s13
  %s16 = scalar_select 0, %s15, %s13
  // Predicated region
  $region2: #{gat_node_forward.1} parent=0 // pred_check
    _
  $region3: #{gat_node_forward.1} parent=0 // pred_check_branch
    %18 = sbr.rel (0) target = $region5
  $region4: #{gat_node_forward.1} parent=0 // pred_region
    _
  $region5: #{gat_node_forward.1} parent=0 // pred_fallthru
    _
  // Predicated region
  $region6: #{gat_node_forward.1} parent=0 // pred_check
    _
  $region7: #{gat_node_forward.1} parent=0 // pred_check_branch
    %20 = sbr.rel (0) target = $region9
  $region8: #{gat_node_forward.1} parent=0 // pred_region
    _
  $region9: #{gat_node_forward.1} parent=0 // pred_fallthru
    _
  // Predicated region
  $region10: #{gat_node_forward.1} parent=0 // pred_check
    _
  $region11: #{gat_node_forward.1} parent=0 // pred_check_branch
    %22 = sbr.rel (0) target = $region13
  $region12: #{gat_node_forward.1} parent=0 // pred_region
    _
  $region13: #{gat_node_forward.1} parent=0 // pred_fallthru
    _
  // Predicated region
  $region14: #{gat_node_forward.1} parent=0 // pred_check
    _
  $region15: #{gat_node_forward.1} parent=0 // pred_check_branch
    %24 = sbr.rel (0) target = $region17
  $region16: #{gat_node_forward.1} parent=0 // pred_region
    _
  $region17: #{gat_node_forward.1} parent=0 // pred_fallthru
    _
  // Predicated region
  $region18: #{gat_node_forward.1} parent=0 // pred_check
    _
  $region19: #{gat_node_forward.1} parent=0 // pred_check_branch
    %26 = sbr.rel (0) target = $region21
  $region20: #{gat_node_forward.1} parent=0 // pred_region
    _
  $region21: #{gat_node_forward.1} parent=0 // pred_fallthru
    _
  // Predicated region
  $region22: #{gat_node_forward.1} parent=0 // pred_check
    _
  $region23: #{gat_node_forward.1} parent=0 // pred_check_branch
    %28 = sbr.rel (0) target = $region25
  $region24: #{gat_node_forward.1} parent=0 // pred_region
    _
  $region25: #{gat_node_forward.1} parent=0 // pred_fallthru
    _
  // Predicated region
  $region26: #{gat_node_forward.1} parent=0 // pred_check
    _
  $region27: #{gat_node_forward.1} parent=0 // pred_check_branch
    %30 = sbr.rel (0) target = $region29
  $region28: #{gat_node_forward.1} parent=0 // pred_region
    _
  $region29: #{gat_node_forward.1} parent=0 // pred_fallthru
    _
  // Predicated region
  $region30: #{gat_node_forward.1} parent=0 // pred_check
    _
  $region31: #{gat_node_forward.1} parent=0 // pred_check_branch
    %32 = sbr.rel (0) target = $region33
  $region32: #{gat_node_forward.1} parent=0 // pred_region
    _
  $region33: #{gat_node_forward.1} parent=0 // pred_fallthru
    _
  // Predicated region
  $region34: #{gat_node_forward.1} parent=0 // pred_check
    _
  $region35: #{gat_node_forward.1} parent=0 // pred_check_branch
    %34 = sbr.rel (0) target = $region37
  $region36: #{gat_node_forward.1} parent=0 // pred_region
    _
  $region37: #{gat_node_forward.1} parent=0 // pred_fallthru
    _
  // Predicated region
  $region38: #{gat_node_forward.1} parent=0 // pred_check
    _
  $region39: #{gat_node_forward.1} parent=0 // pred_check_branch
    %36 = sbr.rel (0) target = $region41
  $region40: #{gat_node_forward.1} parent=0 // pred_region
    _
  $region41: #{gat_node_forward.1} parent=0 // pred_fallthru
    _
  // Predicated region
  $region42: #{gat_node_forward.1} parent=0 // pred_check
    _
  $region43: #{gat_node_forward.1} parent=0 // pred_check_branch
    %38 = sbr.rel (0) target = $region45
  $region44: #{gat_node_forward.1} parent=0 // pred_region
    _
  $region45: #{gat_node_forward.1} parent=0 // pred_fallthru
    _
  // Predicated region
  $region46: #{gat_node_forward.1} parent=0 // pred_check
    _
  $region47: #{gat_node_forward.1} parent=0 // pred_check_branch
    %40 = sbr.rel (0) target = $region49
  $region48: #{gat_node_forward.1} parent=0 // pred_region
    _
  $region49: #{gat_node_forward.1} parent=0 // pred_fallthru
    _
  %v41 = vld [vmem:[%s0] sm:$0xff]
  %v42 = vld [vmem:[%s0 + $0x8] sm:$0xff]
  %vm43 = vcmp.gt.f32.partialorder %v41, 0.0
  %vm44 = vcmp.gt.f32.partialorder %v42, 0.0
  %v45 = vld [vmem:[%s1] sm:$0xff]
  %v46 = vld [vmem:[%s1 + $0x8] sm:$0xff]
  %v47 = vld [vmem:[%s2] sm:$0xff]
  %v48 = vld [vmem:[%s2 + $0x8] sm:$0xff]
  %v49 = vld [vmem:[%s2 + $0x10] sm:$0xff]
  %v50 = vld [vmem:[%s2 + $0x18] sm:$0xff]
  %v51 = vld [vmem:[%s2 + $0x20] sm:$0xff]
  %v52 = vld [vmem:[%s2 + $0x28] sm:$0xff]
  %v53 = vld [vmem:[%s2 + $0x30] sm:$0xff]
  %v54 = vld [vmem:[%s2 + $0x38] sm:$0xff]
  %v55 = vld [vmem:[%s2 + $0x40] sm:$0xff]
  %v56 = vld [vmem:[%s2 + $0x48] sm:$0xff]
  %v57 = vld [vmem:[%s2 + $0x50] sm:$0xff]
  %v58 = vld [vmem:[%s2 + $0x58] sm:$0xff]
  %v59 = vld [vmem:[%s2 + $0x60] sm:$0xff]
  %v60 = vld [vmem:[%s2 + $0x68] sm:$0xff]
  %v61 = vld [vmem:[%s2 + $0x70] sm:$0xff]
  %v62 = vld [vmem:[%s2 + $0x78] sm:$0xff]
  %v63 = vld [vmem:[%s3] sm:$0xff]
  %v64 = vld [vmem:[%s3 + $0x8] sm:$0xff]
  %v65 = vld [vmem:[%s3 + $0x10] sm:$0xff]
  %v66 = vld [vmem:[%s3 + $0x18] sm:$0xff]
  %v67 = vld [vmem:[%s3 + $0x20] sm:$0xff]
  %v68 = vld [vmem:[%s3 + $0x28] sm:$0xff]
  %v69 = vld [vmem:[%s3 + $0x30] sm:$0xff]
  %v70 = vld [vmem:[%s3 + $0x38] sm:$0xff]
  %v71 = vld [vmem:[%s3 + $0x40] sm:$0xff]
  %v72 = vld [vmem:[%s3 + $0x48] sm:$0xff]
  %v73 = vld [vmem:[%s3 + $0x50] sm:$0xff]
  %v74 = vld [vmem:[%s3 + $0x58] sm:$0xff]
  %v75 = vld [vmem:[%s3 + $0x60] sm:$0xff]
  %v76 = vld [vmem:[%s3 + $0x68] sm:$0xff]
  %v77 = vld [vmem:[%s3 + $0x70] sm:$0xff]
  %v78 = vld [vmem:[%s3 + $0x78] sm:$0xff]
  %v79 = vld [vmem:[%s4] sm:$0xff]
  %v80 = vld [vmem:[%s5] sm:$0xff]
  %v81 = vld [vmem:[%s5 + $0x8] sm:$0xff]
  %v82 = vld [vmem:[%s5 + $0x10] sm:$0xff]
  %v83 = vld [vmem:[%s5 + $0x18] sm:$0xff]
  %v84 = vld [vmem:[%s5 + $0x20] sm:$0xff]
  %v85 = vld [vmem:[%s5 + $0x28] sm:$0xff]
  %v86 = vld [vmem:[%s5 + $0x30] sm:$0xff]
  %v87 = vld [vmem:[%s5 + $0x38] sm:$0xff]
  %v88 = vld [vmem:[%s5 + $0x40] sm:$0xff]
  %v89 = vld [vmem:[%s5 + $0x48] sm:$0xff]
  %v90 = vld [vmem:[%s5 + $0x50] sm:$0xff]
  %v91 = vld [vmem:[%s5 + $0x58] sm:$0xff]
  %v92 = vld [vmem:[%s5 + $0x60] sm:$0xff]
  %v93 = vld [vmem:[%s5 + $0x68] sm:$0xff]
  %v94 = vld [vmem:[%s5 + $0x70] sm:$0xff]
  %v95 = vld [vmem:[%s5 + $0x78] sm:$0xff]
  %v96 = vld [vmem:[%s6] sm:$0xff]
  %v97 = vld [vmem:[%s6 + $0x8] sm:$0xff]
  %v98 = vld [vmem:[%s7] sm:$0xff]
  %v99 = vld [vmem:[%s7 + $0x8] sm:$0xff]
  %vm100 = vcmask 130048
  %v102 = vsel %vm100, %v96, 0
  %v105 = vsel %vm100, %v97, 0
  %107 = vmatprep.subr.mxu0 0.0
  %108 = vmatpush1.msra.mxu0 %v98
  %109 = vmatprep.subr.mxu0 0.0
  %110 = vmatpush1.msra.mxu0 %v99
  %111 = vmatprep.subr.mxu0 0.0
  %112 = vmatpush1.msra.mxu0 0.0
  %113 = vmatprep.subr.mxu0 0.0
  %114 = vmatpush1.msra.mxu0 0.0
  %115 = vmatprep.subr.mxu0 0.0
  %116 = vmatpush1.msra.mxu0 0.0
  %117 = vmatprep.subr.mxu0 0.0
  %118 = vmatpush1.msra.mxu0 0.0
  %119 = vmatprep.subr.mxu0 0.0
  %120 = vmatpush1.msra.mxu0 0.0
  %121 = vmatprep.subr.mxu0 0.0
  %122 = vmatpush1.msra.mxu0 0.0
  %123 = vmatprep.subr.mxu0 0.0
  %124 = vmatpush1.msra.mxu0 0.0
  %125 = vmatprep.subr.mxu0 0.0
  %126 = vmatpush1.msra.mxu0 0.0
  %127 = vmatprep.subr.mxu0 0.0
  %128 = vmatpush1.msra.mxu0 0.0
  %129 = vmatprep.subr.mxu0 0.0
  %130 = vmatpush1.msra.mxu0 0.0
  %131 = vmatprep.subr.mxu0 0.0
  %132 = vmatpush1.msra.mxu0 0.0
  %133 = vmatprep.subr.mxu0 0.0
  %134 = vmatpush1.msra.mxu0 0.0
  %135 = vmatprep.subr.mxu0 0.0
  %136 = vmatpush1.msra.mxu0 0.0
  %137 = vmatprep.subr.mxu0 0.0
  %138 = vmatpush1.msra.mxu0 0.0
  %139 = vmatprep.subr.mxu0 0.0
  %140 = vmatpush1.msra.mxu0 0.0
  %141 = vmatprep.subr.mxu0 0.0
  %142 = vmatpush1.msra.mxu0 0.0
  %143 = vmatprep.subr.mxu0 0.0
  %144 = vmatpush1.msra.mxu0 0.0
  %145 = vmatprep.subr.mxu0 0.0
  %146 = vmatpush1.msra.mxu0 0.0
  %147 = vmatprep.subr.mxu0 0.0
  %148 = vmatpush1.msra.mxu0 0.0
  %149 = vmatprep.subr.mxu0 0.0
  %150 = vmatpush1.msra.mxu0 0.0
  %151 = vmatprep.subr.mxu0 0.0
  %152 = vmatpush1.msra.mxu0 0.0
  %153 = vmatprep.subr.mxu0 0.0
  %154 = vmatpush1.msra.mxu0 0.0
  %155 = vmatprep.subr.mxu0 0.0
  %156 = vmatpush1.msra.mxu0 0.0
  %157 = vmatprep.subr.mxu0 0.0
  %158 = vmatpush1.msra.mxu0 0.0
  %159 = vmatprep.subr.mxu0 0.0
  %160 = vmatpush1.msra.mxu0 0.0
  %161 = vmatprep.subr.mxu0 0.0
  %162 = vmatpush1.msra.mxu0 0.0
  %163 = vmatprep.subr.mxu0 0.0
  %164 = vmatpush1.msra.mxu0 0.0
  %165 = vmatprep.subr.mxu0 0.0
  %166 = vmatpush1.msra.mxu0 0.0
  %167 = vmatprep.subr.mxu0 0.0
  %168 = vmatpush1.msra.mxu0 0.0
  %169 = vmatprep.subr.mxu0 0.0
  %170 = vmatpush1.msra.mxu0 0.0
  %171 = vmatprep.mubr.f32.mxu0 0.0
  %172 = vmatmul.mubr.f32.gmra.mrb[0].mxu0 %v102
  %v173 = vpop.f32.mrb[0].mxu0
  %v174 = vadd.f32 0.0, %v173
  %v175 = vpop.f32.mrb[0].mxu0
  %176 = vmatprep.mubr.f32.mxu0 0.0
  %177 = vmatmul.mubr.f32.gmra.mrb[0].mxu0 %v105
  %v178 = vpop.f32.mrb[0].mxu0
  %v179 = vadd.f32 0.0, %v178
  %v180 = vpop.f32.mrb[0].mxu0
  %181 = vdwg.mxu0
  %184 = vrot.lane.b32.xlu0 %v174, 64
  %v185 = vpop.permute.xlu0 %184
  %186 = vrot.lane.b32.xlu0 %v179, 64
  %v187 = vpop.permute.xlu0 %186
  %vm188 = vcmask 64512
  %v189 = vsel %vm188, %v185, 0
  %v191 = vsel %vm188, %v187, 0
  %193 = vmatprep.subr.mxu0 0.0
  %194 = vmatpush1.msra.mxu0 %v79
  %195 = vmatprep.subr.mxu0 0.0
  %196 = vmatpush1.msra.mxu0 0.0
  %197 = vmatprep.subr.mxu0 0.0
  %198 = vmatpush1.msra.mxu0 0.0
  %199 = vmatprep.subr.mxu0 0.0
  %200 = vmatpush1.msra.mxu0 0.0
  %201 = vmatprep.subr.mxu0 0.0
  %202 = vmatpush1.msra.mxu0 0.0
  %203 = vmatprep.subr.mxu0 0.0
  %204 = vmatpush1.msra.mxu0 0.0
  %205 = vmatprep.subr.mxu0 0.0
  %206 = vmatpush1.msra.mxu0 0.0
  %207 = vmatprep.subr.mxu0 0.0
  %208 = vmatpush1.msra.mxu0 0.0
  %209 = vmatprep.subr.mxu0 0.0
  %210 = vmatpush1.msra.mxu0 0.0
  %211 = vmatprep.subr.mxu0 0.0
  %212 = vmatpush1.msra.mxu0 0.0
  %213 = vmatprep.subr.mxu0 0.0
  %214 = vmatpush1.msra.mxu0 0.0
  %215 = vmatprep.subr.mxu0 0.0
  %216 = vmatpush1.msra.mxu0 0.0
  %217 = vmatprep.subr.mxu0 0.0
  %218 = vmatpush1.msra.mxu0 0.0
  %219 = vmatprep.subr.mxu0 0.0
  %220 = vmatpush1.msra.mxu0 0.0
  %221 = vmatprep.subr.mxu0 0.0
  %222 = vmatpush1.msra.mxu0 0.0
  %223 = vmatprep.subr.mxu0 0.0
  %224 = vmatpush1.msra.mxu0 0.0
  %225 = vmatprep.subr.mxu0 0.0
  %226 = vmatpush1.msra.mxu0 0.0
  %227 = vmatprep.subr.mxu0 0.0
  %228 = vmatpush1.msra.mxu0 0.0
  %229 = vmatprep.subr.mxu0 0.0
  %230 = vmatpush1.msra.mxu0 0.0
  %231 = vmatprep.subr.mxu0 0.0
  %232 = vmatpush1.msra.mxu0 0.0
  %233 = vmatprep.subr.mxu0 0.0
  %234 = vmatpush1.msra.mxu0 0.0
  %235 = vmatprep.subr.mxu0 0.0
  %236 = vmatpush1.msra.mxu0 0.0
  %237 = vmatprep.subr.mxu0 0.0
  %238 = vmatpush1.msra.mxu0 0.0
  %239 = vmatprep.subr.mxu0 0.0
  %240 = vmatpush1.msra.mxu0 0.0
  %241 = vmatprep.subr.mxu0 0.0
  %242 = vmatpush1.msra.mxu0 0.0
  %243 = vmatprep.subr.mxu0 0.0
  %244 = vmatpush1.msra.mxu0 0.0
  %245 = vmatprep.subr.mxu0 0.0
  %246 = vmatpush1.msra.mxu0 0.0
  %247 = vmatprep.subr.mxu0 0.0
  %248 = vmatpush1.msra.mxu0 0.0
  %249 = vmatprep.subr.mxu0 0.0
  %250 = vmatpush1.msra.mxu0 0.0
  %251 = vmatprep.subr.mxu0 0.0
  %252 = vmatpush1.msra.mxu0 0.0
  %253 = vmatprep.subr.mxu0 0.0
  %254 = vmatpush1.msra.mxu0 0.0
  %255 = vmatprep.subr.mxu0 0.0
  %256 = vmatpush1.msra.mxu0 0.0
  %257 = vmatprep.mubr.f32.mxu0 0.0
  %258 = vmatmul.mubr.f32.gmra.mrb[0].mxu0 %v189
  %v259 = vpop.f32.mrb[0].mxu0
  %v260 = vadd.f32 0.0, %v259
  %v261 = vpop.f32.mrb[0].mxu0
  %262 = vmatprep.mubr.f32.mxu0 0.0
  %263 = vmatmul.mubr.f32.gmra.mrb[0].mxu0 %v191
  %v264 = vpop.f32.mrb[0].mxu0
  %v265 = vadd.f32 0.0, %v264
  %v266 = vpop.f32.mrb[0].mxu0
  %267 = vdwg.mxu0
  %v268 = vmul.f32 %v260, %v45
  %v269 = vmul.f32 %v265, %v46
  %v271 = vsel %vm100, 1.0, 0
  %273 = vmatprep.subr.mxu0 0.0
  %274 = vmatpush1.msra.mxu0 %v268
  %275 = vmatprep.subr.mxu0 0.0
  %276 = vmatpush1.msra.mxu0 %v269
  %277 = vmatprep.subr.mxu0 0.0
  %278 = vmatpush1.msra.mxu0 0.0
  %279 = vmatprep.subr.mxu0 0.0
  %280 = vmatpush1.msra.mxu0 0.0
  %281 = vmatprep.subr.mxu0 0.0
  %282 = vmatpush1.msra.mxu0 0.0
  %283 = vmatprep.subr.mxu0 0.0
  %284 = vmatpush1.msra.mxu0 0.0
  %285 = vmatprep.subr.mxu0 0.0
  %286 = vmatpush1.msra.mxu0 0.0
  %287 = vmatprep.subr.mxu0 0.0
  %288 = vmatpush1.msra.mxu0 0.0
  %289 = vmatprep.subr.mxu0 0.0
  %290 = vmatpush1.msra.mxu0 0.0
  %291 = vmatprep.subr.mxu0 0.0
  %292 = vmatpush1.msra.mxu0 0.0
  %293 = vmatprep.subr.mxu0 0.0
  %294 = vmatpush1.msra.mxu0 0.0
  %295 = vmatprep.subr.mxu0 0.0
  %296 = vmatpush1.msra.mxu0 0.0
  %297 = vmatprep.subr.mxu0 0.0
  %298 = vmatpush1.msra.mxu0 0.0
  %299 = vmatprep.subr.mxu0 0.0
  %300 = vmatpush1.msra.mxu0 0.0
  %301 = vmatprep.subr.mxu0 0.0
  %302 = vmatpush1.msra.mxu0 0.0
  %303 = vmatprep.subr.mxu0 0.0
  %304 = vmatpush1.msra.mxu0 0.0
  %305 = vmatprep.subr.mxu0 0.0
  %306 = vmatpush1.msra.mxu0 0.0
  %307 = vmatprep.subr.mxu0 0.0
  %308 = vmatpush1.msra.mxu0 0.0
  %309 = vmatprep.subr.mxu0 0.0
  %310 = vmatpush1.msra.mxu0 0.0
  %311 = vmatprep.subr.mxu0 0.0
  %312 = vmatpush1.msra.mxu0 0.0
  %313 = vmatprep.subr.mxu0 0.0
  %314 = vmatpush1.msra.mxu0 0.0
  %315 = vmatprep.subr.mxu0 0.0
  %316 = vmatpush1.msra.mxu0 0.0
  %317 = vmatprep.subr.mxu0 0.0
  %318 = vmatpush1.msra.mxu0 0.0
  %319 = vmatprep.subr.mxu0 0.0
  %320 = vmatpush1.msra.mxu0 0.0
  %321 = vmatprep.subr.mxu0 0.0
  %322 = vmatpush1.msra.mxu0 0.0
  %323 = vmatprep.subr.mxu0 0.0
  %324 = vmatpush1.msra.mxu0 0.0
  %325 = vmatprep.subr.mxu0 0.0
  %326 = vmatpush1.msra.mxu0 0.0
  %327 = vmatprep.subr.mxu0 0.0
  %328 = vmatpush1.msra.mxu0 0.0
  %329 = vmatprep.subr.mxu0 0.0
  %330 = vmatpush1.msra.mxu0 0.0
  %331 = vmatprep.subr.mxu0 0.0
  %332 = vmatpush1.msra.mxu0 0.0
  %333 = vmatprep.subr.mxu0 0.0
  %334 = vmatpush1.msra.mxu0 0.0
  %335 = vmatprep.subr.mxu0 0.0
  %336 = vmatpush1.msra.mxu0 0.0
  %337 = vmatprep.mubr.f32.mxu0 0.0
  %338 = vmatmul.mubr.f32.gmra.mrb[0].mxu0 %v271
  %v339 = vpop.f32.mrb[0].mxu0
  %v340 = vadd.f32 0.0, %v339
  %v341 = vpop.f32.mrb[0].mxu0
  %342 = vdwg.mxu0
  %v343 = vlaneseq
  %v344 = vshrl.u32 %v343, 7
  %v345 = vsub.s32 0, %v344
  %v346 = vrot.slane %v340, %v345
  %347 = vrot.lane.b32.xlu0 %v174, 56
  %v348 = vpop.permute.xlu0 %347
  %349 = vrot.lane.b32.xlu0 %v179, 56
  %v350 = vpop.permute.xlu0 %349
  %v351 = vsel %vm188, %v348, 0
  %v353 = vsel %vm188, %v350, 0
  %355 = vmatprep.subr.mxu0 0.0
  %356 = vmatpush1.msra.mxu0 %v79
  %357 = vmatprep.subr.mxu0 0.0
  %358 = vmatpush1.msra.mxu0 0.0
  %359 = vmatprep.subr.mxu0 0.0
  %360 = vmatpush1.msra.mxu0 0.0
  %361 = vmatprep.subr.mxu0 0.0
  %362 = vmatpush1.msra.mxu0 0.0
  %363 = vmatprep.subr.mxu0 0.0
  %364 = vmatpush1.msra.mxu0 0.0
  %365 = vmatprep.subr.mxu0 0.0
  %366 = vmatpush1.msra.mxu0 0.0
  %367 = vmatprep.subr.mxu0 0.0
  %368 = vmatpush1.msra.mxu0 0.0
  %369 = vmatprep.subr.mxu0 0.0
  %370 = vmatpush1.msra.mxu0 0.0
  %371 = vmatprep.subr.mxu0 0.0
  %372 = vmatpush1.msra.mxu0 0.0
  %373 = vmatprep.subr.mxu0 0.0
  %374 = vmatpush1.msra.mxu0 0.0
  %375 = vmatprep.subr.mxu0 0.0
  %376 = vmatpush1.msra.mxu0 0.0
  %377 = vmatprep.subr.mxu0 0.0
  %378 = vmatpush1.msra.mxu0 0.0
  %379 = vmatprep.subr.mxu0 0.0
  %380 = vmatpush1.msra.mxu0 0.0
  %381 = vmatprep.subr.mxu0 0.0
  %382 = vmatpush1.msra.mxu0 0.0
  %383 = vmatprep.subr.mxu0 0.0
  %384 = vmatpush1.msra.mxu0 0.0
  %385 = vmatprep.subr.mxu0 0.0
  %386 = vmatpush1.msra.mxu0 0.0
  %387 = vmatprep.subr.mxu0 0.0
  %388 = vmatpush1.msra.mxu0 0.0
  %389 = vmatprep.subr.mxu0 0.0
  %390 = vmatpush1.msra.mxu0 0.0
  %391 = vmatprep.subr.mxu0 0.0
  %392 = vmatpush1.msra.mxu0 0.0
  %393 = vmatprep.subr.mxu0 0.0
  %394 = vmatpush1.msra.mxu0 0.0
  %395 = vmatprep.subr.mxu0 0.0
  %396 = vmatpush1.msra.mxu0 0.0
  %397 = vmatprep.subr.mxu0 0.0
  %398 = vmatpush1.msra.mxu0 0.0
  %399 = vmatprep.subr.mxu0 0.0
  %400 = vmatpush1.msra.mxu0 0.0
  %401 = vmatprep.subr.mxu0 0.0
  %402 = vmatpush1.msra.mxu0 0.0
  %403 = vmatprep.subr.mxu0 0.0
  %404 = vmatpush1.msra.mxu0 0.0
  %405 = vmatprep.subr.mxu0 0.0
  %406 = vmatpush1.msra.mxu0 0.0
  %407 = vmatprep.subr.mxu0 0.0
  %408 = vmatpush1.msra.mxu0 0.0
  %409 = vmatprep.subr.mxu0 0.0
  %410 = vmatpush1.msra.mxu0 0.0
  %411 = vmatprep.subr.mxu0 0.0
  %412 = vmatpush1.msra.mxu0 0.0
  %413 = vmatprep.subr.mxu0 0.0
  %414 = vmatpush1.msra.mxu0 0.0
  %415 = vmatprep.subr.mxu0 0.0
  %416 = vmatpush1.msra.mxu0 0.0
  %417 = vmatprep.subr.mxu0 0.0
  %418 = vmatpush1.msra.mxu0 0.0
  %419 = vmatprep.mubr.f32.mxu0 0.0
  %420 = vmatmul.mubr.f32.gmra.mrb[0].mxu0 %v351
  %v421 = vpop.f32.mrb[0].mxu0
  %v422 = vadd.f32 %v346, %v421
  %v423 = vpop.f32.mrb[0].mxu0
  %424 = vmatprep.mubr.f32.mxu0 0.0
  %425 = vmatmul.mubr.f32.gmra.mrb[0].mxu0 %v353
  %v426 = vpop.f32.mrb[0].mxu0
  %v427 = vadd.f32 %v346, %v426
  %v428 = vpop.f32.mrb[0].mxu0
  %429 = vdwg.mxu0
  %vm430 = vcmp.gt.f32.partialorder %v422, 0.0
  %vm431 = vcmp.gt.f32.partialorder %v427, 0.0
  %v432 = vmul.f32 %v422, 0.2
  %v433 = vmul.f32 %v427, 0.2
  %v434 = vsel %vm430, %v422, %v432
  %v435 = vsel %vm431, %v427, %v433
  %v436 = vsel %vm43, %v434, -1e+30
  %v437 = vsel %vm44, %v435, -1e+30
  %438 = vmax.xlane.f32.xlu0 %v436
  %v439 = vpop.xlane.xlu0 %438
  %440 = vmax.xlane.f32.xlu0 %v437
  %v441 = vpop.xlane.xlu0 %440
  %v442 = vsub.f32 %v436, %v439
  %v443 = vsub.f32 %v437, %v441
  %v444 = vmul.f32 %v442, 1.442695
  %v445 = vpow.pop %v444
  %v446 = vmul.f32 %v443, 1.442695
  %v447 = vpow.pop %v446
  %v448 = vsel %vm43, %v445, 0.0
  %v449 = vsel %vm44, %v447, 0.0
  %450 = vmatprep.subr.mxu0 0.0
  %451 = vmatpush1.msra.mxu0 %v80
  %452 = vmatprep.subr.mxu0 0.0
  %453 = vmatpush1.msra.mxu0 %v81
  %454 = vmatprep.subr.mxu0 0.0
  %455 = vmatpush1.msra.mxu0 %v82
  %456 = vmatprep.subr.mxu0 0.0
  %457 = vmatpush1.msra.mxu0 %v83
  %458 = vmatprep.subr.mxu0 0.0
  %459 = vmatpush1.msra.mxu0 %v84
  %460 = vmatprep.subr.mxu0 0.0
  %461 = vmatpush1.msra.mxu0 %v85
  %462 = vmatprep.subr.mxu0 0.0
  %463 = vmatpush1.msra.mxu0 %v86
  %464 = vmatprep.subr.mxu0 0.0
  %465 = vmatpush1.msra.mxu0 %v87
  %466 = vmatprep.subr.mxu0 0.0
  %467 = vmatpush1.msra.mxu0 %v88
  %468 = vmatprep.subr.mxu0 0.0
  %469 = vmatpush1.msra.mxu0 %v89
  %470 = vmatprep.subr.mxu0 0.0
  %471 = vmatpush1.msra.mxu0 %v90
  %472 = vmatprep.subr.mxu0 0.0
  %473 = vmatpush1.msra.mxu0 %v91
  %474 = vmatprep.subr.mxu0 0.0
  %475 = vmatpush1.msra.mxu0 %v92
  %476 = vmatprep.subr.mxu0 0.0
  %477 = vmatpush1.msra.mxu0 %v93
  %478 = vmatprep.subr.mxu0 0.0
  %479 = vmatpush1.msra.mxu0 %v94
  %480 = vmatprep.subr.mxu0 0.0
  %481 = vmatpush1.msra.mxu0 %v95
  %482 = vmatprep.subr.mxu0 0.0
  %483 = vmatpush1.msra.mxu0 0.0
  %484 = vmatprep.subr.mxu0 0.0
  %485 = vmatpush1.msra.mxu0 0.0
  %486 = vmatprep.subr.mxu0 0.0
  %487 = vmatpush1.msra.mxu0 0.0
  %488 = vmatprep.subr.mxu0 0.0
  %489 = vmatpush1.msra.mxu0 0.0
  %490 = vmatprep.subr.mxu0 0.0
  %491 = vmatpush1.msra.mxu0 0.0
  %492 = vmatprep.subr.mxu0 0.0
  %493 = vmatpush1.msra.mxu0 0.0
  %494 = vmatprep.subr.mxu0 0.0
  %495 = vmatpush1.msra.mxu0 0.0
  %496 = vmatprep.subr.mxu0 0.0
  %497 = vmatpush1.msra.mxu0 0.0
  %498 = vmatprep.subr.mxu0 0.0
  %499 = vmatpush1.msra.mxu0 0.0
  %500 = vmatprep.subr.mxu0 0.0
  %501 = vmatpush1.msra.mxu0 0.0
  %502 = vmatprep.subr.mxu0 0.0
  %503 = vmatpush1.msra.mxu0 0.0
  %504 = vmatprep.subr.mxu0 0.0
  %505 = vmatpush1.msra.mxu0 0.0
  %506 = vmatprep.subr.mxu0 0.0
  %507 = vmatpush1.msra.mxu0 0.0
  %508 = vmatprep.subr.mxu0 0.0
  %509 = vmatpush1.msra.mxu0 0.0
  %510 = vmatprep.subr.mxu0 0.0
  %511 = vmatpush1.msra.mxu0 0.0
  %512 = vmatprep.subr.mxu0 0.0
  %513 = vmatpush1.msra.mxu0 0.0
  %514 = vmatprep.mubr.f32.mxu0 0.0
  %515 = vmatmul.mubr.f32.gmra.mrb[0].mxu0 %v448
  %v516 = vpop.f32.mrb[0].mxu0
  %v517 = vadd.f32 0.0, %v516
  %v518 = vpop.f32.mrb[0].mxu0
  %519 = vmatprep.mubr.f32.mxu0 0.0
  %520 = vmatmul.mubr.f32.gmra.mrb[0].mxu0 %v449
  %v521 = vpop.f32.mrb[0].mxu0
  %v522 = vadd.f32 0.0, %v521
  %v523 = vpop.f32.mrb[0].mxu0
  %524 = vdwg.mxu0
  %v525 = vmax.f32 %v517, 1e-20
  %v526 = vmax.f32 %v522, 1e-20
  %v527 = vrcp.pop %v525
  %v528 = vrcp.pop %v526
  %v530 = vsel %vm188, %v527, 0
  %v533 = vsel %vm188, %v528, 0
  %535 = vmatprep.subr.mxu0 0.0
  %536 = vmatpush1.msra.mxu0 %v79
  %537 = vmatprep.subr.mxu0 0.0
  %538 = vmatpush1.msra.mxu0 0.0
  %539 = vmatprep.subr.mxu0 0.0
  %540 = vmatpush1.msra.mxu0 0.0
  %541 = vmatprep.subr.mxu0 0.0
  %542 = vmatpush1.msra.mxu0 0.0
  %543 = vmatprep.subr.mxu0 0.0
  %544 = vmatpush1.msra.mxu0 0.0
  %545 = vmatprep.subr.mxu0 0.0
  %546 = vmatpush1.msra.mxu0 0.0
  %547 = vmatprep.subr.mxu0 0.0
  %548 = vmatpush1.msra.mxu0 0.0
  %549 = vmatprep.subr.mxu0 0.0
  %550 = vmatpush1.msra.mxu0 0.0
  %551 = vmatprep.subr.mxu0 0.0
  %552 = vmatpush1.msra.mxu0 0.0
  %553 = vmatprep.subr.mxu0 0.0
  %554 = vmatpush1.msra.mxu0 0.0
  %555 = vmatprep.subr.mxu0 0.0
  %556 = vmatpush1.msra.mxu0 0.0
  %557 = vmatprep.subr.mxu0 0.0
  %558 = vmatpush1.msra.mxu0 0.0
  %559 = vmatprep.subr.mxu0 0.0
  %560 = vmatpush1.msra.mxu0 0.0
  %561 = vmatprep.subr.mxu0 0.0
  %562 = vmatpush1.msra.mxu0 0.0
  %563 = vmatprep.subr.mxu0 0.0
  %564 = vmatpush1.msra.mxu0 0.0
  %565 = vmatprep.subr.mxu0 0.0
  %566 = vmatpush1.msra.mxu0 0.0
  %567 = vmatprep.subr.mxu0 0.0
  %568 = vmatpush1.msra.mxu0 0.0
  %569 = vmatprep.subr.mxu0 0.0
  %570 = vmatpush1.msra.mxu0 0.0
  %571 = vmatprep.subr.mxu0 0.0
  %572 = vmatpush1.msra.mxu0 0.0
  %573 = vmatprep.subr.mxu0 0.0
  %574 = vmatpush1.msra.mxu0 0.0
  %575 = vmatprep.subr.mxu0 0.0
  %576 = vmatpush1.msra.mxu0 0.0
  %577 = vmatprep.subr.mxu0 0.0
  %578 = vmatpush1.msra.mxu0 0.0
  %579 = vmatprep.subr.mxu0 0.0
  %580 = vmatpush1.msra.mxu0 0.0
  %581 = vmatprep.subr.mxu0 0.0
  %582 = vmatpush1.msra.mxu0 0.0
  %583 = vmatprep.subr.mxu0 0.0
  %584 = vmatpush1.msra.mxu0 0.0
  %585 = vmatprep.subr.mxu0 0.0
  %586 = vmatpush1.msra.mxu0 0.0
  %587 = vmatprep.subr.mxu0 0.0
  %588 = vmatpush1.msra.mxu0 0.0
  %589 = vmatprep.subr.mxu0 0.0
  %590 = vmatpush1.msra.mxu0 0.0
  %591 = vmatprep.subr.mxu0 0.0
  %592 = vmatpush1.msra.mxu0 0.0
  %593 = vmatprep.subr.mxu0 0.0
  %594 = vmatpush1.msra.mxu0 0.0
  %595 = vmatprep.subr.mxu0 0.0
  %596 = vmatpush1.msra.mxu0 0.0
  %597 = vmatprep.subr.mxu0 0.0
  %598 = vmatpush1.msra.mxu0 0.0
  %599 = vmatprep.mubr.f32.mxu0 0.0
  %600 = vmatmul.mubr.f32.gmra.mrb[0].mxu0 %v530
  %v601 = vpop.f32.mrb[0].mxu0
  %v602 = vadd.f32 0.0, %v601
  %v603 = vpop.f32.mrb[0].mxu0
  %604 = vmatprep.mubr.f32.mxu0 0.0
  %605 = vmatmul.mubr.f32.gmra.mrb[0].mxu0 %v533
  %v606 = vpop.f32.mrb[0].mxu0
  %v607 = vadd.f32 0.0, %v606
  %v608 = vpop.f32.mrb[0].mxu0
  %609 = vdwg.mxu0
  %v610 = vmul.f32 %v448, %v602
  %v611 = vmul.f32 %v449, %v607
  %v613 = vsel %vm100, %v47, 0
  %v616 = vsel %vm100, %v48, 0
  %v619 = vsel %vm100, %v49, 0
  %v622 = vsel %vm100, %v50, 0
  %v625 = vsel %vm100, %v51, 0
  %v628 = vsel %vm100, %v52, 0
  %v631 = vsel %vm100, %v53, 0
  %v634 = vsel %vm100, %v54, 0
  %v637 = vsel %vm100, %v55, 0
  %v640 = vsel %vm100, %v56, 0
  %v643 = vsel %vm100, %v57, 0
  %v646 = vsel %vm100, %v58, 0
  %v649 = vsel %vm100, %v59, 0
  %v652 = vsel %vm100, %v60, 0
  %v655 = vsel %vm100, %v61, 0
  %v658 = vsel %vm100, %v62, 0
  %660 = vmatprep.subr.mxu0 0.0
  %661 = vmatpush1.msra.mxu0 %v174
  %662 = vmatprep.subr.mxu0 0.0
  %663 = vmatpush1.msra.mxu0 %v179
  %664 = vmatprep.subr.mxu0 0.0
  %665 = vmatpush1.msra.mxu0 0.0
  %666 = vmatprep.subr.mxu0 0.0
  %667 = vmatpush1.msra.mxu0 0.0
  %668 = vmatprep.subr.mxu0 0.0
  %669 = vmatpush1.msra.mxu0 0.0
  %670 = vmatprep.subr.mxu0 0.0
  %671 = vmatpush1.msra.mxu0 0.0
  %672 = vmatprep.subr.mxu0 0.0
  %673 = vmatpush1.msra.mxu0 0.0
  %674 = vmatprep.subr.mxu0 0.0
  %675 = vmatpush1.msra.mxu0 0.0
  %676 = vmatprep.subr.mxu0 0.0
  %677 = vmatpush1.msra.mxu0 0.0
  %678 = vmatprep.subr.mxu0 0.0
  %679 = vmatpush1.msra.mxu0 0.0
  %680 = vmatprep.subr.mxu0 0.0
  %681 = vmatpush1.msra.mxu0 0.0
  %682 = vmatprep.subr.mxu0 0.0
  %683 = vmatpush1.msra.mxu0 0.0
  %684 = vmatprep.subr.mxu0 0.0
  %685 = vmatpush1.msra.mxu0 0.0
  %686 = vmatprep.subr.mxu0 0.0
  %687 = vmatpush1.msra.mxu0 0.0
  %688 = vmatprep.subr.mxu0 0.0
  %689 = vmatpush1.msra.mxu0 0.0
  %690 = vmatprep.subr.mxu0 0.0
  %691 = vmatpush1.msra.mxu0 0.0
  %692 = vmatprep.subr.mxu0 0.0
  %693 = vmatpush1.msra.mxu0 0.0
  %694 = vmatprep.subr.mxu0 0.0
  %695 = vmatpush1.msra.mxu0 0.0
  %696 = vmatprep.subr.mxu0 0.0
  %697 = vmatpush1.msra.mxu0 0.0
  %698 = vmatprep.subr.mxu0 0.0
  %699 = vmatpush1.msra.mxu0 0.0
  %700 = vmatprep.subr.mxu0 0.0
  %701 = vmatpush1.msra.mxu0 0.0
  %702 = vmatprep.subr.mxu0 0.0
  %703 = vmatpush1.msra.mxu0 0.0
  %704 = vmatprep.subr.mxu0 0.0
  %705 = vmatpush1.msra.mxu0 0.0
  %706 = vmatprep.subr.mxu0 0.0
  %707 = vmatpush1.msra.mxu0 0.0
  %708 = vmatprep.subr.mxu0 0.0
  %709 = vmatpush1.msra.mxu0 0.0
  %710 = vmatprep.subr.mxu0 0.0
  %711 = vmatpush1.msra.mxu0 0.0
  %712 = vmatprep.subr.mxu0 0.0
  %713 = vmatpush1.msra.mxu0 0.0
  %714 = vmatprep.subr.mxu0 0.0
  %715 = vmatpush1.msra.mxu0 0.0
  %716 = vmatprep.subr.mxu0 0.0
  %717 = vmatpush1.msra.mxu0 0.0
  %718 = vmatprep.subr.mxu0 0.0
  %719 = vmatpush1.msra.mxu0 0.0
  %720 = vmatprep.subr.mxu0 0.0
  %721 = vmatpush1.msra.mxu0 0.0
  %722 = vmatprep.subr.mxu0 0.0
  %723 = vmatpush1.msra.mxu0 0.0
  %724 = vmatprep.mubr.f32.mxu0 0.0
  %725 = vmatmul.mubr.f32.gmra.mrb[0].mxu0 %v613
  %v726 = vpop.f32.mrb[0].mxu0
  %v727 = vadd.f32 0.0, %v726
  %v728 = vpop.f32.mrb[0].mxu0
  %729 = vmatprep.mubr.f32.mxu0 0.0
  %730 = vmatmul.mubr.f32.gmra.mrb[0].mxu0 %v616
  %v731 = vpop.f32.mrb[0].mxu0
  %v732 = vadd.f32 0.0, %v731
  %v733 = vpop.f32.mrb[0].mxu0
  %734 = vmatprep.mubr.f32.mxu0 0.0
  %735 = vmatmul.mubr.f32.gmra.mrb[0].mxu0 %v619
  %v736 = vpop.f32.mrb[0].mxu0
  %v737 = vadd.f32 0.0, %v736
  %v738 = vpop.f32.mrb[0].mxu0
  %739 = vmatprep.mubr.f32.mxu0 0.0
  %740 = vmatmul.mubr.f32.gmra.mrb[0].mxu0 %v622
  %v741 = vpop.f32.mrb[0].mxu0
  %v742 = vadd.f32 0.0, %v741
  %v743 = vpop.f32.mrb[0].mxu0
  %744 = vmatprep.mubr.f32.mxu0 0.0
  %745 = vmatmul.mubr.f32.gmra.mrb[0].mxu0 %v625
  %v746 = vpop.f32.mrb[0].mxu0
  %v747 = vadd.f32 0.0, %v746
  %v748 = vpop.f32.mrb[0].mxu0
  %749 = vmatprep.mubr.f32.mxu0 0.0
  %750 = vmatmul.mubr.f32.gmra.mrb[0].mxu0 %v628
  %v751 = vpop.f32.mrb[0].mxu0
  %v752 = vadd.f32 0.0, %v751
  %v753 = vpop.f32.mrb[0].mxu0
  %754 = vmatprep.mubr.f32.mxu0 0.0
  %755 = vmatmul.mubr.f32.gmra.mrb[0].mxu0 %v631
  %v756 = vpop.f32.mrb[0].mxu0
  %v757 = vadd.f32 0.0, %v756
  %v758 = vpop.f32.mrb[0].mxu0
  %759 = vmatprep.mubr.f32.mxu0 0.0
  %760 = vmatmul.mubr.f32.gmra.mrb[0].mxu0 %v634
  %v761 = vpop.f32.mrb[0].mxu0
  %v762 = vadd.f32 0.0, %v761
  %v763 = vpop.f32.mrb[0].mxu0
  %764 = vmatprep.mubr.f32.mxu0 0.0
  %765 = vmatmul.mubr.f32.gmra.mrb[0].mxu0 %v637
  %v766 = vpop.f32.mrb[0].mxu0
  %v767 = vadd.f32 0.0, %v766
  %v768 = vpop.f32.mrb[0].mxu0
  %769 = vmatprep.mubr.f32.mxu0 0.0
  %770 = vmatmul.mubr.f32.gmra.mrb[0].mxu0 %v640
  %v771 = vpop.f32.mrb[0].mxu0
  %v772 = vadd.f32 0.0, %v771
  %v773 = vpop.f32.mrb[0].mxu0
  %774 = vmatprep.mubr.f32.mxu0 0.0
  %775 = vmatmul.mubr.f32.gmra.mrb[0].mxu0 %v643
  %v776 = vpop.f32.mrb[0].mxu0
  %v777 = vadd.f32 0.0, %v776
  %v778 = vpop.f32.mrb[0].mxu0
  %779 = vmatprep.mubr.f32.mxu0 0.0
  %780 = vmatmul.mubr.f32.gmra.mrb[0].mxu0 %v646
  %v781 = vpop.f32.mrb[0].mxu0
  %v782 = vadd.f32 0.0, %v781
  %v783 = vpop.f32.mrb[0].mxu0
  %784 = vmatprep.mubr.f32.mxu0 0.0
  %785 = vmatmul.mubr.f32.gmra.mrb[0].mxu0 %v649
  %v786 = vpop.f32.mrb[0].mxu0
  %v787 = vadd.f32 0.0, %v786
  %v788 = vpop.f32.mrb[0].mxu0
  %789 = vmatprep.mubr.f32.mxu0 0.0
  %790 = vmatmul.mubr.f32.gmra.mrb[0].mxu0 %v652
  %v791 = vpop.f32.mrb[0].mxu0
  %v792 = vadd.f32 0.0, %v791
  %v793 = vpop.f32.mrb[0].mxu0
  %794 = vmatprep.mubr.f32.mxu0 0.0
  %795 = vmatmul.mubr.f32.gmra.mrb[0].mxu0 %v655
  %v796 = vpop.f32.mrb[0].mxu0
  %v797 = vadd.f32 0.0, %v796
  %v798 = vpop.f32.mrb[0].mxu0
  %799 = vmatprep.mubr.f32.mxu0 0.0
  %800 = vmatmul.mubr.f32.gmra.mrb[0].mxu0 %v658
  %v801 = vpop.f32.mrb[0].mxu0
  %v802 = vadd.f32 0.0, %v801
  %v803 = vpop.f32.mrb[0].mxu0
  %804 = vdwg.mxu0
  %v805 = vmul.f32 %v727, %v63
  %v806 = vmul.f32 %v732, %v64
  %v807 = vmul.f32 %v737, %v65
  %v808 = vmul.f32 %v742, %v66
  %v809 = vmul.f32 %v747, %v67
  %v810 = vmul.f32 %v752, %v68
  %v811 = vmul.f32 %v757, %v69
  %v812 = vmul.f32 %v762, %v70
  %v813 = vmul.f32 %v767, %v71
  %v814 = vmul.f32 %v772, %v72
  %v815 = vmul.f32 %v777, %v73
  %v816 = vmul.f32 %v782, %v74
  %v817 = vmul.f32 %v787, %v75
  %v818 = vmul.f32 %v792, %v76
  %v819 = vmul.f32 %v797, %v77
  %v820 = vmul.f32 %v802, %v78
  %821 = vmatprep.subr.mxu0 0.0
  %822 = vmatpush1.msra.mxu0 %v805
  %823 = vmatprep.subr.mxu0 0.0
  %824 = vmatpush1.msra.mxu0 %v806
  %825 = vmatprep.subr.mxu0 0.0
  %826 = vmatpush1.msra.mxu0 %v807
  %827 = vmatprep.subr.mxu0 0.0
  %828 = vmatpush1.msra.mxu0 %v808
  %829 = vmatprep.subr.mxu0 0.0
  %830 = vmatpush1.msra.mxu0 %v809
  %831 = vmatprep.subr.mxu0 0.0
  %832 = vmatpush1.msra.mxu0 %v810
  %833 = vmatprep.subr.mxu0 0.0
  %834 = vmatpush1.msra.mxu0 %v811
  %835 = vmatprep.subr.mxu0 0.0
  %836 = vmatpush1.msra.mxu0 %v812
  %837 = vmatprep.subr.mxu0 0.0
  %838 = vmatpush1.msra.mxu0 %v813
  %839 = vmatprep.subr.mxu0 0.0
  %840 = vmatpush1.msra.mxu0 %v814
  %841 = vmatprep.subr.mxu0 0.0
  %842 = vmatpush1.msra.mxu0 %v815
  %843 = vmatprep.subr.mxu0 0.0
  %844 = vmatpush1.msra.mxu0 %v816
  %845 = vmatprep.subr.mxu0 0.0
  %846 = vmatpush1.msra.mxu0 %v817
  %847 = vmatprep.subr.mxu0 0.0
  %848 = vmatpush1.msra.mxu0 %v818
  %849 = vmatprep.subr.mxu0 0.0
  %850 = vmatpush1.msra.mxu0 %v819
  %851 = vmatprep.subr.mxu0 0.0
  %852 = vmatpush1.msra.mxu0 %v820
  %853 = vmatprep.subr.mxu0 0.0
  %854 = vmatpush1.msra.mxu0 0.0
  %855 = vmatprep.subr.mxu0 0.0
  %856 = vmatpush1.msra.mxu0 0.0
  %857 = vmatprep.subr.mxu0 0.0
  %858 = vmatpush1.msra.mxu0 0.0
  %859 = vmatprep.subr.mxu0 0.0
  %860 = vmatpush1.msra.mxu0 0.0
  %861 = vmatprep.subr.mxu0 0.0
  %862 = vmatpush1.msra.mxu0 0.0
  %863 = vmatprep.subr.mxu0 0.0
  %864 = vmatpush1.msra.mxu0 0.0
  %865 = vmatprep.subr.mxu0 0.0
  %866 = vmatpush1.msra.mxu0 0.0
  %867 = vmatprep.subr.mxu0 0.0
  %868 = vmatpush1.msra.mxu0 0.0
  %869 = vmatprep.subr.mxu0 0.0
  %870 = vmatpush1.msra.mxu0 0.0
  %871 = vmatprep.subr.mxu0 0.0
  %872 = vmatpush1.msra.mxu0 0.0
  %873 = vmatprep.subr.mxu0 0.0
  %874 = vmatpush1.msra.mxu0 0.0
  %875 = vmatprep.subr.mxu0 0.0
  %876 = vmatpush1.msra.mxu0 0.0
  %877 = vmatprep.subr.mxu0 0.0
  %878 = vmatpush1.msra.mxu0 0.0
  %879 = vmatprep.subr.mxu0 0.0
  %880 = vmatpush1.msra.mxu0 0.0
  %881 = vmatprep.subr.mxu0 0.0
  %882 = vmatpush1.msra.mxu0 0.0
  %883 = vmatprep.subr.mxu0 0.0
  %884 = vmatpush1.msra.mxu0 0.0
  %885 = vmatprep.mubr.f32.mxu0 0.0
  %886 = vmatmul.mubr.f32.gmra.mrb[0].mxu0 %v610
  %v887 = vpop.f32.mrb[0].mxu0
  %v888 = vadd.f32 0.0, %v887
  %v889 = vpop.f32.mrb[0].mxu0
  %890 = vmatprep.mubr.f32.mxu0 0.0
  %891 = vmatmul.mubr.f32.gmra.mrb[0].mxu0 %v611
  %v892 = vpop.f32.mrb[0].mxu0
  %v893 = vadd.f32 0.0, %v892
  %v894 = vpop.f32.mrb[0].mxu0
  %895 = vdwg.mxu0
  %v896 = vmax.f32 %v888, 0.0
  %v897 = vmax.f32 %v893, 0.0
  %v898 = vld [vmem:[%s8] sm:$0xff]
  %v899 = vld [vmem:[%s8 + $0x8] sm:$0xff]
  %v900 = vld [vmem:[%s8 + $0x10] sm:$0xff]
  %v901 = vld [vmem:[%s8 + $0x18] sm:$0xff]
  %v902 = vld [vmem:[%s8 + $0x20] sm:$0xff]
  %v903 = vld [vmem:[%s8 + $0x28] sm:$0xff]
  %v904 = vld [vmem:[%s8 + $0x30] sm:$0xff]
  %v905 = vld [vmem:[%s8 + $0x38] sm:$0xff]
  %vm906 = vcmask 523264
  %v908 = vsel %vm906, %v896, 0
  %v911 = vsel %vm906, %v897, 0
  %913 = vmatprep.subr.mxu0 0.0
  %914 = vmatpush1.msra.mxu0 %v898
  %915 = vmatprep.subr.mxu0 0.0
  %916 = vmatpush1.msra.mxu0 %v899
  %917 = vmatprep.subr.mxu0 0.0
  %918 = vmatpush1.msra.mxu0 %v900
  %919 = vmatprep.subr.mxu0 0.0
  %920 = vmatpush1.msra.mxu0 %v901
  %921 = vmatprep.subr.mxu0 0.0
  %922 = vmatpush1.msra.mxu0 %v902
  %923 = vmatprep.subr.mxu0 0.0
  %924 = vmatpush1.msra.mxu0 %v903
  %925 = vmatprep.subr.mxu0 0.0
  %926 = vmatpush1.msra.mxu0 %v904
  %927 = vmatprep.subr.mxu0 0.0
  %928 = vmatpush1.msra.mxu0 %v905
  %929 = vmatprep.subr.mxu0 0.0
  %930 = vmatpush1.msra.mxu0 0.0
  %931 = vmatprep.subr.mxu0 0.0
  %932 = vmatpush1.msra.mxu0 0.0
  %933 = vmatprep.subr.mxu0 0.0
  %934 = vmatpush1.msra.mxu0 0.0
  %935 = vmatprep.subr.mxu0 0.0
  %936 = vmatpush1.msra.mxu0 0.0
  %937 = vmatprep.subr.mxu0 0.0
  %938 = vmatpush1.msra.mxu0 0.0
  %939 = vmatprep.subr.mxu0 0.0
  %940 = vmatpush1.msra.mxu0 0.0
  %941 = vmatprep.subr.mxu0 0.0
  %942 = vmatpush1.msra.mxu0 0.0
  %943 = vmatprep.subr.mxu0 0.0
  %944 = vmatpush1.msra.mxu0 0.0
  %945 = vmatprep.subr.mxu0 0.0
  %946 = vmatpush1.msra.mxu0 0.0
  %947 = vmatprep.subr.mxu0 0.0
  %948 = vmatpush1.msra.mxu0 0.0
  %949 = vmatprep.subr.mxu0 0.0
  %950 = vmatpush1.msra.mxu0 0.0
  %951 = vmatprep.subr.mxu0 0.0
  %952 = vmatpush1.msra.mxu0 0.0
  %953 = vmatprep.subr.mxu0 0.0
  %954 = vmatpush1.msra.mxu0 0.0
  %955 = vmatprep.subr.mxu0 0.0
  %956 = vmatpush1.msra.mxu0 0.0
  %957 = vmatprep.subr.mxu0 0.0
  %958 = vmatpush1.msra.mxu0 0.0
  %959 = vmatprep.subr.mxu0 0.0
  %960 = vmatpush1.msra.mxu0 0.0
  %961 = vmatprep.subr.mxu0 0.0
  %962 = vmatpush1.msra.mxu0 0.0
  %963 = vmatprep.subr.mxu0 0.0
  %964 = vmatpush1.msra.mxu0 0.0
  %965 = vmatprep.subr.mxu0 0.0
  %966 = vmatpush1.msra.mxu0 0.0
  %967 = vmatprep.subr.mxu0 0.0
  %968 = vmatpush1.msra.mxu0 0.0
  %969 = vmatprep.subr.mxu0 0.0
  %970 = vmatpush1.msra.mxu0 0.0
  %971 = vmatprep.subr.mxu0 0.0
  %972 = vmatpush1.msra.mxu0 0.0
  %973 = vmatprep.subr.mxu0 0.0
  %974 = vmatpush1.msra.mxu0 0.0
  %975 = vmatprep.subr.mxu0 0.0
  %976 = vmatpush1.msra.mxu0 0.0
  %977 = vmatprep.mubr.f32.mxu0 0.0
  %978 = vmatmul.mubr.f32.gmra.mrb[0].mxu0 %v908
  %v979 = vpop.f32.mrb[0].mxu0
  %v980 = vadd.f32 0.0, %v979
  %v981 = vpop.f32.mrb[0].mxu0
  %982 = vmatprep.mubr.f32.mxu0 0.0
  %983 = vmatmul.mubr.f32.gmra.mrb[0].mxu0 %v911
  %v984 = vpop.f32.mrb[0].mxu0
  %v985 = vadd.f32 0.0, %v984
  %v986 = vpop.f32.mrb[0].mxu0
  %987 = vdwg.mxu0
  %990 = vrot.lane.b32.xlu0 %v980, 64
  %v991 = vpop.permute.xlu0 %990
  %992 = vrot.lane.b32.xlu0 %v985, 64
  %v993 = vpop.permute.xlu0 %992
  %v994 = vsel %vm188, %v991, 0
  %v996 = vsel %vm188, %v993, 0
  %998 = vmatprep.subr.mxu0 0.0
  %999 = vmatpush1.msra.mxu0 %v79
  %1000 = vmatprep.subr.mxu0 0.0
  %1001 = vmatpush1.msra.mxu0 0.0
  %1002 = vmatprep.subr.mxu0 0.0
  %1003 = vmatpush1.msra.mxu0 0.0
  %1004 = vmatprep.subr.mxu0 0.0
  %1005 = vmatpush1.msra.mxu0 0.0
  %1006 = vmatprep.subr.mxu0 0.0
  %1007 = vmatpush1.msra.mxu0 0.0
  %1008 = vmatprep.subr.mxu0 0.0
  %1009 = vmatpush1.msra.mxu0 0.0
  %1010 = vmatprep.subr.mxu0 0.0
  %1011 = vmatpush1.msra.mxu0 0.0
  %1012 = vmatprep.subr.mxu0 0.0
  %1013 = vmatpush1.msra.mxu0 0.0
  %1014 = vmatprep.subr.mxu0 0.0
  %1015 = vmatpush1.msra.mxu0 0.0
  %1016 = vmatprep.subr.mxu0 0.0
  %1017 = vmatpush1.msra.mxu0 0.0
  %1018 = vmatprep.subr.mxu0 0.0
  %1019 = vmatpush1.msra.mxu0 0.0
  %1020 = vmatprep.subr.mxu0 0.0
  %1021 = vmatpush1.msra.mxu0 0.0
  %1022 = vmatprep.subr.mxu0 0.0
  %1023 = vmatpush1.msra.mxu0 0.0
  %1024 = vmatprep.subr.mxu0 0.0
  %1025 = vmatpush1.msra.mxu0 0.0
  %1026 = vmatprep.subr.mxu0 0.0
  %1027 = vmatpush1.msra.mxu0 0.0
  %1028 = vmatprep.subr.mxu0 0.0
  %1029 = vmatpush1.msra.mxu0 0.0
  %1030 = vmatprep.subr.mxu0 0.0
  %1031 = vmatpush1.msra.mxu0 0.0
  %1032 = vmatprep.subr.mxu0 0.0
  %1033 = vmatpush1.msra.mxu0 0.0
  %1034 = vmatprep.subr.mxu0 0.0
  %1035 = vmatpush1.msra.mxu0 0.0
  %1036 = vmatprep.subr.mxu0 0.0
  %1037 = vmatpush1.msra.mxu0 0.0
  %1038 = vmatprep.subr.mxu0 0.0
  %1039 = vmatpush1.msra.mxu0 0.0
  %1040 = vmatprep.subr.mxu0 0.0
  %1041 = vmatpush1.msra.mxu0 0.0
  %1042 = vmatprep.subr.mxu0 0.0
  %1043 = vmatpush1.msra.mxu0 0.0
  %1044 = vmatprep.subr.mxu0 0.0
  %1045 = vmatpush1.msra.mxu0 0.0
  %1046 = vmatprep.subr.mxu0 0.0
  %1047 = vmatpush1.msra.mxu0 0.0
  %1048 = vmatprep.subr.mxu0 0.0
  %1049 = vmatpush1.msra.mxu0 0.0
  %1050 = vmatprep.subr.mxu0 0.0
  %1051 = vmatpush1.msra.mxu0 0.0
  %1052 = vmatprep.subr.mxu0 0.0
  %1053 = vmatpush1.msra.mxu0 0.0
  %1054 = vmatprep.subr.mxu0 0.0
  %1055 = vmatpush1.msra.mxu0 0.0
  %1056 = vmatprep.subr.mxu0 0.0
  %1057 = vmatpush1.msra.mxu0 0.0
  %1058 = vmatprep.subr.mxu0 0.0
  %1059 = vmatpush1.msra.mxu0 0.0
  %1060 = vmatprep.subr.mxu0 0.0
  %1061 = vmatpush1.msra.mxu0 0.0
  %1062 = vmatprep.mubr.f32.mxu0 0.0
  %1063 = vmatmul.mubr.f32.gmra.mrb[0].mxu0 %v994
  %v1064 = vpop.f32.mrb[0].mxu0
  %v1065 = vadd.f32 0.0, %v1064
  %v1066 = vpop.f32.mrb[0].mxu0
  %1067 = vmatprep.mubr.f32.mxu0 0.0
  %1068 = vmatmul.mubr.f32.gmra.mrb[0].mxu0 %v996
  %v1069 = vpop.f32.mrb[0].mxu0
  %v1070 = vadd.f32 0.0, %v1069
  %v1071 = vpop.f32.mrb[0].mxu0
  %1072 = vdwg.mxu0
  %v1073 = vmul.f32 %v1065, %v45
  %v1074 = vmul.f32 %v1070, %v46
  %1075 = vmatprep.subr.mxu0 0.0
  %1076 = vmatpush1.msra.mxu0 %v1073
  %1077 = vmatprep.subr.mxu0 0.0
  %1078 = vmatpush1.msra.mxu0 %v1074
  %1079 = vmatprep.subr.mxu0 0.0
  %1080 = vmatpush1.msra.mxu0 0.0
  %1081 = vmatprep.subr.mxu0 0.0
  %1082 = vmatpush1.msra.mxu0 0.0
  %1083 = vmatprep.subr.mxu0 0.0
  %1084 = vmatpush1.msra.mxu0 0.0
  %1085 = vmatprep.subr.mxu0 0.0
  %1086 = vmatpush1.msra.mxu0 0.0
  %1087 = vmatprep.subr.mxu0 0.0
  %1088 = vmatpush1.msra.mxu0 0.0
  %1089 = vmatprep.subr.mxu0 0.0
  %1090 = vmatpush1.msra.mxu0 0.0
  %1091 = vmatprep.subr.mxu0 0.0
  %1092 = vmatpush1.msra.mxu0 0.0
  %1093 = vmatprep.subr.mxu0 0.0
  %1094 = vmatpush1.msra.mxu0 0.0
  %1095 = vmatprep.subr.mxu0 0.0
  %1096 = vmatpush1.msra.mxu0 0.0
  %1097 = vmatprep.subr.mxu0 0.0
  %1098 = vmatpush1.msra.mxu0 0.0
  %1099 = vmatprep.subr.mxu0 0.0
  %1100 = vmatpush1.msra.mxu0 0.0
  %1101 = vmatprep.subr.mxu0 0.0
  %1102 = vmatpush1.msra.mxu0 0.0
  %1103 = vmatprep.subr.mxu0 0.0
  %1104 = vmatpush1.msra.mxu0 0.0
  %1105 = vmatprep.subr.mxu0 0.0
  %1106 = vmatpush1.msra.mxu0 0.0
  %1107 = vmatprep.subr.mxu0 0.0
  %1108 = vmatpush1.msra.mxu0 0.0
  %1109 = vmatprep.subr.mxu0 0.0
  %1110 = vmatpush1.msra.mxu0 0.0
  %1111 = vmatprep.subr.mxu0 0.0
  %1112 = vmatpush1.msra.mxu0 0.0
  %1113 = vmatprep.subr.mxu0 0.0
  %1114 = vmatpush1.msra.mxu0 0.0
  %1115 = vmatprep.subr.mxu0 0.0
  %1116 = vmatpush1.msra.mxu0 0.0
  %1117 = vmatprep.subr.mxu0 0.0
  %1118 = vmatpush1.msra.mxu0 0.0
  %1119 = vmatprep.subr.mxu0 0.0
  %1120 = vmatpush1.msra.mxu0 0.0
  %1121 = vmatprep.subr.mxu0 0.0
  %1122 = vmatpush1.msra.mxu0 0.0
  %1123 = vmatprep.subr.mxu0 0.0
  %1124 = vmatpush1.msra.mxu0 0.0
  %1125 = vmatprep.subr.mxu0 0.0
  %1126 = vmatpush1.msra.mxu0 0.0
  %1127 = vmatprep.subr.mxu0 0.0
  %1128 = vmatpush1.msra.mxu0 0.0
  %1129 = vmatprep.subr.mxu0 0.0
  %1130 = vmatpush1.msra.mxu0 0.0
  %1131 = vmatprep.subr.mxu0 0.0
  %1132 = vmatpush1.msra.mxu0 0.0
  %1133 = vmatprep.subr.mxu0 0.0
  %1134 = vmatpush1.msra.mxu0 0.0
  %1135 = vmatprep.subr.mxu0 0.0
  %1136 = vmatpush1.msra.mxu0 0.0
  %1137 = vmatprep.subr.mxu0 0.0
  %1138 = vmatpush1.msra.mxu0 0.0
  %1139 = vmatprep.mubr.f32.mxu0 0.0
  %1140 = vmatmul.mubr.f32.gmra.mrb[0].mxu0 %v271
  %v1141 = vpop.f32.mrb[0].mxu0
  %v1142 = vadd.f32 0.0, %v1141
  %v1143 = vpop.f32.mrb[0].mxu0
  %1144 = vdwg.mxu0
  %v1145 = vlaneseq
  %v1146 = vshrl.u32 %v1145, 7
  %v1147 = vsub.s32 0, %v1146
  %v1148 = vrot.slane %v1142, %v1147
  %1149 = vrot.lane.b32.xlu0 %v980, 56
  %v1150 = vpop.permute.xlu0 %1149
  %1151 = vrot.lane.b32.xlu0 %v985, 56
  %v1152 = vpop.permute.xlu0 %1151
  %v1153 = vsel %vm188, %v1150, 0
  %v1155 = vsel %vm188, %v1152, 0
  %1157 = vmatprep.subr.mxu0 0.0
  %1158 = vmatpush1.msra.mxu0 %v79
  %1159 = vmatprep.subr.mxu0 0.0
  %1160 = vmatpush1.msra.mxu0 0.0
  %1161 = vmatprep.subr.mxu0 0.0
  %1162 = vmatpush1.msra.mxu0 0.0
  %1163 = vmatprep.subr.mxu0 0.0
  %1164 = vmatpush1.msra.mxu0 0.0
  %1165 = vmatprep.subr.mxu0 0.0
  %1166 = vmatpush1.msra.mxu0 0.0
  %1167 = vmatprep.subr.mxu0 0.0
  %1168 = vmatpush1.msra.mxu0 0.0
  %1169 = vmatprep.subr.mxu0 0.0
  %1170 = vmatpush1.msra.mxu0 0.0
  %1171 = vmatprep.subr.mxu0 0.0
  %1172 = vmatpush1.msra.mxu0 0.0
  %1173 = vmatprep.subr.mxu0 0.0
  %1174 = vmatpush1.msra.mxu0 0.0
  %1175 = vmatprep.subr.mxu0 0.0
  %1176 = vmatpush1.msra.mxu0 0.0
  %1177 = vmatprep.subr.mxu0 0.0
  %1178 = vmatpush1.msra.mxu0 0.0
  %1179 = vmatprep.subr.mxu0 0.0
  %1180 = vmatpush1.msra.mxu0 0.0
  %1181 = vmatprep.subr.mxu0 0.0
  %1182 = vmatpush1.msra.mxu0 0.0
  %1183 = vmatprep.subr.mxu0 0.0
  %1184 = vmatpush1.msra.mxu0 0.0
  %1185 = vmatprep.subr.mxu0 0.0
  %1186 = vmatpush1.msra.mxu0 0.0
  %1187 = vmatprep.subr.mxu0 0.0
  %1188 = vmatpush1.msra.mxu0 0.0
  %1189 = vmatprep.subr.mxu0 0.0
  %1190 = vmatpush1.msra.mxu0 0.0
  %1191 = vmatprep.subr.mxu0 0.0
  %1192 = vmatpush1.msra.mxu0 0.0
  %1193 = vmatprep.subr.mxu0 0.0
  %1194 = vmatpush1.msra.mxu0 0.0
  %1195 = vmatprep.subr.mxu0 0.0
  %1196 = vmatpush1.msra.mxu0 0.0
  %1197 = vmatprep.subr.mxu0 0.0
  %1198 = vmatpush1.msra.mxu0 0.0
  %1199 = vmatprep.subr.mxu0 0.0
  %1200 = vmatpush1.msra.mxu0 0.0
  %1201 = vmatprep.subr.mxu0 0.0
  %1202 = vmatpush1.msra.mxu0 0.0
  %1203 = vmatprep.subr.mxu0 0.0
  %1204 = vmatpush1.msra.mxu0 0.0
  %1205 = vmatprep.subr.mxu0 0.0
  %1206 = vmatpush1.msra.mxu0 0.0
  %1207 = vmatprep.subr.mxu0 0.0
  %1208 = vmatpush1.msra.mxu0 0.0
  %1209 = vmatprep.subr.mxu0 0.0
  %1210 = vmatpush1.msra.mxu0 0.0
  %1211 = vmatprep.subr.mxu0 0.0
  %1212 = vmatpush1.msra.mxu0 0.0
  %1213 = vmatprep.subr.mxu0 0.0
  %1214 = vmatpush1.msra.mxu0 0.0
  %1215 = vmatprep.subr.mxu0 0.0
  %1216 = vmatpush1.msra.mxu0 0.0
  %1217 = vmatprep.subr.mxu0 0.0
  %1218 = vmatpush1.msra.mxu0 0.0
  %1219 = vmatprep.subr.mxu0 0.0
  %1220 = vmatpush1.msra.mxu0 0.0
  %1221 = vmatprep.mubr.f32.mxu0 0.0
  %1222 = vmatmul.mubr.f32.gmra.mrb[0].mxu0 %v1153
  %v1223 = vpop.f32.mrb[0].mxu0
  %v1224 = vadd.f32 %v1148, %v1223
  %v1225 = vpop.f32.mrb[0].mxu0
  %1226 = vmatprep.mubr.f32.mxu0 0.0
  %1227 = vmatmul.mubr.f32.gmra.mrb[0].mxu0 %v1155
  %v1228 = vpop.f32.mrb[0].mxu0
  %v1229 = vadd.f32 %v1148, %v1228
  %v1230 = vpop.f32.mrb[0].mxu0
  %1231 = vdwg.mxu0
  %vm1232 = vcmp.gt.f32.partialorder %v1224, 0.0
  %vm1233 = vcmp.gt.f32.partialorder %v1229, 0.0
  %v1234 = vmul.f32 %v1224, 0.2
  %v1235 = vmul.f32 %v1229, 0.2
  %v1236 = vsel %vm1232, %v1224, %v1234
  %v1237 = vsel %vm1233, %v1229, %v1235
  %v1238 = vsel %vm43, %v1236, -1e+30
  %v1239 = vsel %vm44, %v1237, -1e+30
  %1240 = vmax.xlane.f32.xlu0 %v1238
  %v1241 = vpop.xlane.xlu0 %1240
  %1242 = vmax.xlane.f32.xlu0 %v1239
  %v1243 = vpop.xlane.xlu0 %1242
  %v1244 = vsub.f32 %v1238, %v1241
  %v1245 = vsub.f32 %v1239, %v1243
  %v1246 = vmul.f32 %v1244, 1.442695
  %v1247 = vpow.pop %v1246
  %v1248 = vmul.f32 %v1245, 1.442695
  %v1249 = vpow.pop %v1248
  %v1250 = vsel %vm43, %v1247, 0.0
  %v1251 = vsel %vm44, %v1249, 0.0
  %1252 = vmatprep.subr.mxu0 0.0
  %1253 = vmatpush1.msra.mxu0 %v80
  %1254 = vmatprep.subr.mxu0 0.0
  %1255 = vmatpush1.msra.mxu0 %v81
  %1256 = vmatprep.subr.mxu0 0.0
  %1257 = vmatpush1.msra.mxu0 %v82
  %1258 = vmatprep.subr.mxu0 0.0
  %1259 = vmatpush1.msra.mxu0 %v83
  %1260 = vmatprep.subr.mxu0 0.0
  %1261 = vmatpush1.msra.mxu0 %v84
  %1262 = vmatprep.subr.mxu0 0.0
  %1263 = vmatpush1.msra.mxu0 %v85
  %1264 = vmatprep.subr.mxu0 0.0
  %1265 = vmatpush1.msra.mxu0 %v86
  %1266 = vmatprep.subr.mxu0 0.0
  %1267 = vmatpush1.msra.mxu0 %v87
  %1268 = vmatprep.subr.mxu0 0.0
  %1269 = vmatpush1.msra.mxu0 %v88
  %1270 = vmatprep.subr.mxu0 0.0
  %1271 = vmatpush1.msra.mxu0 %v89
  %1272 = vmatprep.subr.mxu0 0.0
  %1273 = vmatpush1.msra.mxu0 %v90
  %1274 = vmatprep.subr.mxu0 0.0
  %1275 = vmatpush1.msra.mxu0 %v91
  %1276 = vmatprep.subr.mxu0 0.0
  %1277 = vmatpush1.msra.mxu0 %v92
  %1278 = vmatprep.subr.mxu0 0.0
  %1279 = vmatpush1.msra.mxu0 %v93
  %1280 = vmatprep.subr.mxu0 0.0
  %1281 = vmatpush1.msra.mxu0 %v94
  %1282 = vmatprep.subr.mxu0 0.0
  %1283 = vmatpush1.msra.mxu0 %v95
  %1284 = vmatprep.subr.mxu0 0.0
  %1285 = vmatpush1.msra.mxu0 0.0
  %1286 = vmatprep.subr.mxu0 0.0
  %1287 = vmatpush1.msra.mxu0 0.0
  %1288 = vmatprep.subr.mxu0 0.0
  %1289 = vmatpush1.msra.mxu0 0.0
  %1290 = vmatprep.subr.mxu0 0.0
  %1291 = vmatpush1.msra.mxu0 0.0
  %1292 = vmatprep.subr.mxu0 0.0
  %1293 = vmatpush1.msra.mxu0 0.0
  %1294 = vmatprep.subr.mxu0 0.0
  %1295 = vmatpush1.msra.mxu0 0.0
  %1296 = vmatprep.subr.mxu0 0.0
  %1297 = vmatpush1.msra.mxu0 0.0
  %1298 = vmatprep.subr.mxu0 0.0
  %1299 = vmatpush1.msra.mxu0 0.0
  %1300 = vmatprep.subr.mxu0 0.0
  %1301 = vmatpush1.msra.mxu0 0.0
  %1302 = vmatprep.subr.mxu0 0.0
  %1303 = vmatpush1.msra.mxu0 0.0
  %1304 = vmatprep.subr.mxu0 0.0
  %1305 = vmatpush1.msra.mxu0 0.0
  %1306 = vmatprep.subr.mxu0 0.0
  %1307 = vmatpush1.msra.mxu0 0.0
  %1308 = vmatprep.subr.mxu0 0.0
  %1309 = vmatpush1.msra.mxu0 0.0
  %1310 = vmatprep.subr.mxu0 0.0
  %1311 = vmatpush1.msra.mxu0 0.0
  %1312 = vmatprep.subr.mxu0 0.0
  %1313 = vmatpush1.msra.mxu0 0.0
  %1314 = vmatprep.subr.mxu0 0.0
  %1315 = vmatpush1.msra.mxu0 0.0
  %1316 = vmatprep.mubr.f32.mxu0 0.0
  %1317 = vmatmul.mubr.f32.gmra.mrb[0].mxu0 %v1250
  %v1318 = vpop.f32.mrb[0].mxu0
  %v1319 = vadd.f32 0.0, %v1318
  %v1320 = vpop.f32.mrb[0].mxu0
  %1321 = vmatprep.mubr.f32.mxu0 0.0
  %1322 = vmatmul.mubr.f32.gmra.mrb[0].mxu0 %v1251
  %v1323 = vpop.f32.mrb[0].mxu0
  %v1324 = vadd.f32 0.0, %v1323
  %v1325 = vpop.f32.mrb[0].mxu0
  %1326 = vdwg.mxu0
  %v1327 = vmax.f32 %v1319, 1e-20
  %v1328 = vmax.f32 %v1324, 1e-20
  %v1329 = vrcp.pop %v1327
  %v1330 = vrcp.pop %v1328
  %v1332 = vsel %vm188, %v1329, 0
  %v1335 = vsel %vm188, %v1330, 0
  %1337 = vmatprep.subr.mxu0 0.0
  %1338 = vmatpush1.msra.mxu0 %v79
  %1339 = vmatprep.subr.mxu0 0.0
  %1340 = vmatpush1.msra.mxu0 0.0
  %1341 = vmatprep.subr.mxu0 0.0
  %1342 = vmatpush1.msra.mxu0 0.0
  %1343 = vmatprep.subr.mxu0 0.0
  %1344 = vmatpush1.msra.mxu0 0.0
  %1345 = vmatprep.subr.mxu0 0.0
  %1346 = vmatpush1.msra.mxu0 0.0
  %1347 = vmatprep.subr.mxu0 0.0
  %1348 = vmatpush1.msra.mxu0 0.0
  %1349 = vmatprep.subr.mxu0 0.0
  %1350 = vmatpush1.msra.mxu0 0.0
  %1351 = vmatprep.subr.mxu0 0.0
  %1352 = vmatpush1.msra.mxu0 0.0
  %1353 = vmatprep.subr.mxu0 0.0
  %1354 = vmatpush1.msra.mxu0 0.0
  %1355 = vmatprep.subr.mxu0 0.0
  %1356 = vmatpush1.msra.mxu0 0.0
  %1357 = vmatprep.subr.mxu0 0.0
  %1358 = vmatpush1.msra.mxu0 0.0
  %1359 = vmatprep.subr.mxu0 0.0
  %1360 = vmatpush1.msra.mxu0 0.0
  %1361 = vmatprep.subr.mxu0 0.0
  %1362 = vmatpush1.msra.mxu0 0.0
  %1363 = vmatprep.subr.mxu0 0.0
  %1364 = vmatpush1.msra.mxu0 0.0
  %1365 = vmatprep.subr.mxu0 0.0
  %1366 = vmatpush1.msra.mxu0 0.0
  %1367 = vmatprep.subr.mxu0 0.0
  %1368 = vmatpush1.msra.mxu0 0.0
  %1369 = vmatprep.subr.mxu0 0.0
  %1370 = vmatpush1.msra.mxu0 0.0
  %1371 = vmatprep.subr.mxu0 0.0
  %1372 = vmatpush1.msra.mxu0 0.0
  %1373 = vmatprep.subr.mxu0 0.0
  %1374 = vmatpush1.msra.mxu0 0.0
  %1375 = vmatprep.subr.mxu0 0.0
  %1376 = vmatpush1.msra.mxu0 0.0
  %1377 = vmatprep.subr.mxu0 0.0
  %1378 = vmatpush1.msra.mxu0 0.0
  %1379 = vmatprep.subr.mxu0 0.0
  %1380 = vmatpush1.msra.mxu0 0.0
  %1381 = vmatprep.subr.mxu0 0.0
  %1382 = vmatpush1.msra.mxu0 0.0
  %1383 = vmatprep.subr.mxu0 0.0
  %1384 = vmatpush1.msra.mxu0 0.0
  %1385 = vmatprep.subr.mxu0 0.0
  %1386 = vmatpush1.msra.mxu0 0.0
  %1387 = vmatprep.subr.mxu0 0.0
  %1388 = vmatpush1.msra.mxu0 0.0
  %1389 = vmatprep.subr.mxu0 0.0
  %1390 = vmatpush1.msra.mxu0 0.0
  %1391 = vmatprep.subr.mxu0 0.0
  %1392 = vmatpush1.msra.mxu0 0.0
  %1393 = vmatprep.subr.mxu0 0.0
  %1394 = vmatpush1.msra.mxu0 0.0
  %1395 = vmatprep.subr.mxu0 0.0
  %1396 = vmatpush1.msra.mxu0 0.0
  %1397 = vmatprep.subr.mxu0 0.0
  %1398 = vmatpush1.msra.mxu0 0.0
  %1399 = vmatprep.subr.mxu0 0.0
  %1400 = vmatpush1.msra.mxu0 0.0
  %1401 = vmatprep.mubr.f32.mxu0 0.0
  %1402 = vmatmul.mubr.f32.gmra.mrb[0].mxu0 %v1332
  %v1403 = vpop.f32.mrb[0].mxu0
  %v1404 = vadd.f32 0.0, %v1403
  %v1405 = vpop.f32.mrb[0].mxu0
  %1406 = vmatprep.mubr.f32.mxu0 0.0
  %1407 = vmatmul.mubr.f32.gmra.mrb[0].mxu0 %v1335
  %v1408 = vpop.f32.mrb[0].mxu0
  %v1409 = vadd.f32 0.0, %v1408
  %v1410 = vpop.f32.mrb[0].mxu0
  %1411 = vdwg.mxu0
  %v1412 = vmul.f32 %v1250, %v1404
  %v1413 = vmul.f32 %v1251, %v1409
  %1414 = vmatprep.subr.mxu0 0.0
  %1415 = vmatpush1.msra.mxu0 %v980
  %1416 = vmatprep.subr.mxu0 0.0
  %1417 = vmatpush1.msra.mxu0 %v985
  %1418 = vmatprep.subr.mxu0 0.0
  %1419 = vmatpush1.msra.mxu0 0.0
  %1420 = vmatprep.subr.mxu0 0.0
  %1421 = vmatpush1.msra.mxu0 0.0
  %1422 = vmatprep.subr.mxu0 0.0
  %1423 = vmatpush1.msra.mxu0 0.0
  %1424 = vmatprep.subr.mxu0 0.0
  %1425 = vmatpush1.msra.mxu0 0.0
  %1426 = vmatprep.subr.mxu0 0.0
  %1427 = vmatpush1.msra.mxu0 0.0
  %1428 = vmatprep.subr.mxu0 0.0
  %1429 = vmatpush1.msra.mxu0 0.0
  %1430 = vmatprep.subr.mxu0 0.0
  %1431 = vmatpush1.msra.mxu0 0.0
  %1432 = vmatprep.subr.mxu0 0.0
  %1433 = vmatpush1.msra.mxu0 0.0
  %1434 = vmatprep.subr.mxu0 0.0
  %1435 = vmatpush1.msra.mxu0 0.0
  %1436 = vmatprep.subr.mxu0 0.0
  %1437 = vmatpush1.msra.mxu0 0.0
  %1438 = vmatprep.subr.mxu0 0.0
  %1439 = vmatpush1.msra.mxu0 0.0
  %1440 = vmatprep.subr.mxu0 0.0
  %1441 = vmatpush1.msra.mxu0 0.0
  %1442 = vmatprep.subr.mxu0 0.0
  %1443 = vmatpush1.msra.mxu0 0.0
  %1444 = vmatprep.subr.mxu0 0.0
  %1445 = vmatpush1.msra.mxu0 0.0
  %1446 = vmatprep.subr.mxu0 0.0
  %1447 = vmatpush1.msra.mxu0 0.0
  %1448 = vmatprep.subr.mxu0 0.0
  %1449 = vmatpush1.msra.mxu0 0.0
  %1450 = vmatprep.subr.mxu0 0.0
  %1451 = vmatpush1.msra.mxu0 0.0
  %1452 = vmatprep.subr.mxu0 0.0
  %1453 = vmatpush1.msra.mxu0 0.0
  %1454 = vmatprep.subr.mxu0 0.0
  %1455 = vmatpush1.msra.mxu0 0.0
  %1456 = vmatprep.subr.mxu0 0.0
  %1457 = vmatpush1.msra.mxu0 0.0
  %1458 = vmatprep.subr.mxu0 0.0
  %1459 = vmatpush1.msra.mxu0 0.0
  %1460 = vmatprep.subr.mxu0 0.0
  %1461 = vmatpush1.msra.mxu0 0.0
  %1462 = vmatprep.subr.mxu0 0.0
  %1463 = vmatpush1.msra.mxu0 0.0
  %1464 = vmatprep.subr.mxu0 0.0
  %1465 = vmatpush1.msra.mxu0 0.0
  %1466 = vmatprep.subr.mxu0 0.0
  %1467 = vmatpush1.msra.mxu0 0.0
  %1468 = vmatprep.subr.mxu0 0.0
  %1469 = vmatpush1.msra.mxu0 0.0
  %1470 = vmatprep.subr.mxu0 0.0
  %1471 = vmatpush1.msra.mxu0 0.0
  %1472 = vmatprep.subr.mxu0 0.0
  %1473 = vmatpush1.msra.mxu0 0.0
  %1474 = vmatprep.subr.mxu0 0.0
  %1475 = vmatpush1.msra.mxu0 0.0
  %1476 = vmatprep.subr.mxu0 0.0
  %1477 = vmatpush1.msra.mxu0 0.0
  %1478 = vmatprep.mubr.f32.mxu0 0.0
  %1479 = vmatmul.mubr.f32.gmra.mrb[0].mxu0 %v613
  %v1480 = vpop.f32.mrb[0].mxu0
  %v1481 = vadd.f32 0.0, %v1480
  %v1482 = vpop.f32.mrb[0].mxu0
  %1483 = vmatprep.mubr.f32.mxu0 0.0
  %1484 = vmatmul.mubr.f32.gmra.mrb[0].mxu0 %v616
  %v1485 = vpop.f32.mrb[0].mxu0
  %v1486 = vadd.f32 0.0, %v1485
  %v1487 = vpop.f32.mrb[0].mxu0
  %1488 = vmatprep.mubr.f32.mxu0 0.0
  %1489 = vmatmul.mubr.f32.gmra.mrb[0].mxu0 %v619
  %v1490 = vpop.f32.mrb[0].mxu0
  %v1491 = vadd.f32 0.0, %v1490
  %v1492 = vpop.f32.mrb[0].mxu0
  %1493 = vmatprep.mubr.f32.mxu0 0.0
  %1494 = vmatmul.mubr.f32.gmra.mrb[0].mxu0 %v622
  %v1495 = vpop.f32.mrb[0].mxu0
  %v1496 = vadd.f32 0.0, %v1495
  %v1497 = vpop.f32.mrb[0].mxu0
  %1498 = vmatprep.mubr.f32.mxu0 0.0
  %1499 = vmatmul.mubr.f32.gmra.mrb[0].mxu0 %v625
  %v1500 = vpop.f32.mrb[0].mxu0
  %v1501 = vadd.f32 0.0, %v1500
  %v1502 = vpop.f32.mrb[0].mxu0
  %1503 = vmatprep.mubr.f32.mxu0 0.0
  %1504 = vmatmul.mubr.f32.gmra.mrb[0].mxu0 %v628
  %v1505 = vpop.f32.mrb[0].mxu0
  %v1506 = vadd.f32 0.0, %v1505
  %v1507 = vpop.f32.mrb[0].mxu0
  %1508 = vmatprep.mubr.f32.mxu0 0.0
  %1509 = vmatmul.mubr.f32.gmra.mrb[0].mxu0 %v631
  %v1510 = vpop.f32.mrb[0].mxu0
  %v1511 = vadd.f32 0.0, %v1510
  %v1512 = vpop.f32.mrb[0].mxu0
  %1513 = vmatprep.mubr.f32.mxu0 0.0
  %1514 = vmatmul.mubr.f32.gmra.mrb[0].mxu0 %v634
  %v1515 = vpop.f32.mrb[0].mxu0
  %v1516 = vadd.f32 0.0, %v1515
  %v1517 = vpop.f32.mrb[0].mxu0
  %1518 = vmatprep.mubr.f32.mxu0 0.0
  %1519 = vmatmul.mubr.f32.gmra.mrb[0].mxu0 %v637
  %v1520 = vpop.f32.mrb[0].mxu0
  %v1521 = vadd.f32 0.0, %v1520
  %v1522 = vpop.f32.mrb[0].mxu0
  %1523 = vmatprep.mubr.f32.mxu0 0.0
  %1524 = vmatmul.mubr.f32.gmra.mrb[0].mxu0 %v640
  %v1525 = vpop.f32.mrb[0].mxu0
  %v1526 = vadd.f32 0.0, %v1525
  %v1527 = vpop.f32.mrb[0].mxu0
  %1528 = vmatprep.mubr.f32.mxu0 0.0
  %1529 = vmatmul.mubr.f32.gmra.mrb[0].mxu0 %v643
  %v1530 = vpop.f32.mrb[0].mxu0
  %v1531 = vadd.f32 0.0, %v1530
  %v1532 = vpop.f32.mrb[0].mxu0
  %1533 = vmatprep.mubr.f32.mxu0 0.0
  %1534 = vmatmul.mubr.f32.gmra.mrb[0].mxu0 %v646
  %v1535 = vpop.f32.mrb[0].mxu0
  %v1536 = vadd.f32 0.0, %v1535
  %v1537 = vpop.f32.mrb[0].mxu0
  %1538 = vmatprep.mubr.f32.mxu0 0.0
  %1539 = vmatmul.mubr.f32.gmra.mrb[0].mxu0 %v649
  %v1540 = vpop.f32.mrb[0].mxu0
  %v1541 = vadd.f32 0.0, %v1540
  %v1542 = vpop.f32.mrb[0].mxu0
  %1543 = vmatprep.mubr.f32.mxu0 0.0
  %1544 = vmatmul.mubr.f32.gmra.mrb[0].mxu0 %v652
  %v1545 = vpop.f32.mrb[0].mxu0
  %v1546 = vadd.f32 0.0, %v1545
  %v1547 = vpop.f32.mrb[0].mxu0
  %1548 = vmatprep.mubr.f32.mxu0 0.0
  %1549 = vmatmul.mubr.f32.gmra.mrb[0].mxu0 %v655
  %v1550 = vpop.f32.mrb[0].mxu0
  %v1551 = vadd.f32 0.0, %v1550
  %v1552 = vpop.f32.mrb[0].mxu0
  %1553 = vmatprep.mubr.f32.mxu0 0.0
  %1554 = vmatmul.mubr.f32.gmra.mrb[0].mxu0 %v658
  %v1555 = vpop.f32.mrb[0].mxu0
  %v1556 = vadd.f32 0.0, %v1555
  %v1557 = vpop.f32.mrb[0].mxu0
  %1558 = vdwg.mxu0
  %v1559 = vmul.f32 %v1481, %v63
  %v1560 = vmul.f32 %v1486, %v64
  %v1561 = vmul.f32 %v1491, %v65
  %v1562 = vmul.f32 %v1496, %v66
  %v1563 = vmul.f32 %v1501, %v67
  %v1564 = vmul.f32 %v1506, %v68
  %v1565 = vmul.f32 %v1511, %v69
  %v1566 = vmul.f32 %v1516, %v70
  %v1567 = vmul.f32 %v1521, %v71
  %v1568 = vmul.f32 %v1526, %v72
  %v1569 = vmul.f32 %v1531, %v73
  %v1570 = vmul.f32 %v1536, %v74
  %v1571 = vmul.f32 %v1541, %v75
  %v1572 = vmul.f32 %v1546, %v76
  %v1573 = vmul.f32 %v1551, %v77
  %v1574 = vmul.f32 %v1556, %v78
  %1575 = vmatprep.subr.mxu0 0.0
  %1576 = vmatpush1.msra.mxu0 %v1559
  %1577 = vmatprep.subr.mxu0 0.0
  %1578 = vmatpush1.msra.mxu0 %v1560
  %1579 = vmatprep.subr.mxu0 0.0
  %1580 = vmatpush1.msra.mxu0 %v1561
  %1581 = vmatprep.subr.mxu0 0.0
  %1582 = vmatpush1.msra.mxu0 %v1562
  %1583 = vmatprep.subr.mxu0 0.0
  %1584 = vmatpush1.msra.mxu0 %v1563
  %1585 = vmatprep.subr.mxu0 0.0
  %1586 = vmatpush1.msra.mxu0 %v1564
  %1587 = vmatprep.subr.mxu0 0.0
  %1588 = vmatpush1.msra.mxu0 %v1565
  %1589 = vmatprep.subr.mxu0 0.0
  %1590 = vmatpush1.msra.mxu0 %v1566
  %1591 = vmatprep.subr.mxu0 0.0
  %1592 = vmatpush1.msra.mxu0 %v1567
  %1593 = vmatprep.subr.mxu0 0.0
  %1594 = vmatpush1.msra.mxu0 %v1568
  %1595 = vmatprep.subr.mxu0 0.0
  %1596 = vmatpush1.msra.mxu0 %v1569
  %1597 = vmatprep.subr.mxu0 0.0
  %1598 = vmatpush1.msra.mxu0 %v1570
  %1599 = vmatprep.subr.mxu0 0.0
  %1600 = vmatpush1.msra.mxu0 %v1571
  %1601 = vmatprep.subr.mxu0 0.0
  %1602 = vmatpush1.msra.mxu0 %v1572
  %1603 = vmatprep.subr.mxu0 0.0
  %1604 = vmatpush1.msra.mxu0 %v1573
  %1605 = vmatprep.subr.mxu0 0.0
  %1606 = vmatpush1.msra.mxu0 %v1574
  %1607 = vmatprep.subr.mxu0 0.0
  %1608 = vmatpush1.msra.mxu0 0.0
  %1609 = vmatprep.subr.mxu0 0.0
  %1610 = vmatpush1.msra.mxu0 0.0
  %1611 = vmatprep.subr.mxu0 0.0
  %1612 = vmatpush1.msra.mxu0 0.0
  %1613 = vmatprep.subr.mxu0 0.0
  %1614 = vmatpush1.msra.mxu0 0.0
  %1615 = vmatprep.subr.mxu0 0.0
  %1616 = vmatpush1.msra.mxu0 0.0
  %1617 = vmatprep.subr.mxu0 0.0
  %1618 = vmatpush1.msra.mxu0 0.0
  %1619 = vmatprep.subr.mxu0 0.0
  %1620 = vmatpush1.msra.mxu0 0.0
  %1621 = vmatprep.subr.mxu0 0.0
  %1622 = vmatpush1.msra.mxu0 0.0
  %1623 = vmatprep.subr.mxu0 0.0
  %1624 = vmatpush1.msra.mxu0 0.0
  %1625 = vmatprep.subr.mxu0 0.0
  %1626 = vmatpush1.msra.mxu0 0.0
  %1627 = vmatprep.subr.mxu0 0.0
  %1628 = vmatpush1.msra.mxu0 0.0
  %1629 = vmatprep.subr.mxu0 0.0
  %1630 = vmatpush1.msra.mxu0 0.0
  %1631 = vmatprep.subr.mxu0 0.0
  %1632 = vmatpush1.msra.mxu0 0.0
  %1633 = vmatprep.subr.mxu0 0.0
  %1634 = vmatpush1.msra.mxu0 0.0
  %1635 = vmatprep.subr.mxu0 0.0
  %1636 = vmatpush1.msra.mxu0 0.0
  %1637 = vmatprep.subr.mxu0 0.0
  %1638 = vmatpush1.msra.mxu0 0.0
  %1639 = vmatprep.mubr.f32.mxu0 0.0
  %1640 = vmatmul.mubr.f32.gmra.mrb[0].mxu0 %v1412
  %v1641 = vpop.f32.mrb[0].mxu0
  %v1642 = vadd.f32 0.0, %v1641
  %v1643 = vpop.f32.mrb[0].mxu0
  %1644 = vmatprep.mubr.f32.mxu0 0.0
  %1645 = vmatmul.mubr.f32.gmra.mrb[0].mxu0 %v1413
  %v1646 = vpop.f32.mrb[0].mxu0
  %v1647 = vadd.f32 0.0, %v1646
  %v1648 = vpop.f32.mrb[0].mxu0
  %1649 = vdwg.mxu0
  %v1650 = vsel %vm906, %v1642, 0.0
  %1651 = vadd.xlane.f32.xlu0 %v1650
  %v1652 = vpop.xlane.xlu0 %1651
  %v1653 = vsel %vm906, %v1647, 0.0
  %1654 = vadd.xlane.f32.xlu0 %v1653
  %v1655 = vpop.xlane.xlu0 %1654
  %v1656 = vrcp.pop 64.0
  %v1657 = vmul.f32 %v1652, %v1656
  %v1658 = vmul.f32 %v1655, %v1656
  %v1659 = vsub.f32 %v1642, %v1657
  %v1660 = vsub.f32 %v1647, %v1658
  %v1661 = vmul.f32 %v1659, %v1659
  %v1662 = vmul.f32 %v1660, %v1660
  %v1663 = vsel %vm906, %v1661, 0.0
  %1664 = vadd.xlane.f32.xlu0 %v1663
  %v1665 = vpop.xlane.xlu0 %1664
  %v1666 = vsel %vm906, %v1662, 0.0
  %1667 = vadd.xlane.f32.xlu0 %v1666
  %v1668 = vpop.xlane.xlu0 %1667
  %v1669 = vmul.f32 %v1665, %v1656
  %v1670 = vmul.f32 %v1668, %v1656
  %v1671 = vadd.f32 %v1669, 1e-05
  %v1672 = vadd.f32 %v1670, 1e-05
  %v1673 = vrsqrt.pop %v1671
  %v1674 = vrsqrt.pop %v1672
  %v1675 = vmul.f32 %v1659, %v1673
  %v1676 = vmul.f32 %v1660, %v1674
  %v1677 = vmax.f32 %v1675, 0.0
  %v1678 = vmax.f32 %v1676, 0.0
  %v1679 = vld [vmem:[%s9] sm:$0xff]
  %v1680 = vld [vmem:[%s9 + $0x8] sm:$0xff]
  %v1681 = vld [vmem:[%s9 + $0x10] sm:$0xff]
  %v1682 = vld [vmem:[%s9 + $0x18] sm:$0xff]
  %v1683 = vld [vmem:[%s9 + $0x20] sm:$0xff]
  %v1684 = vld [vmem:[%s9 + $0x28] sm:$0xff]
  %v1685 = vld [vmem:[%s9 + $0x30] sm:$0xff]
  %v1686 = vld [vmem:[%s9 + $0x38] sm:$0xff]
  %v1688 = vsel %vm906, %v1677, 0
  %v1691 = vsel %vm906, %v1678, 0
  %1693 = vmatprep.subr.mxu0 0.0
  %1694 = vmatpush1.msra.mxu0 %v1679
  %1695 = vmatprep.subr.mxu0 0.0
  %1696 = vmatpush1.msra.mxu0 %v1680
  %1697 = vmatprep.subr.mxu0 0.0
  %1698 = vmatpush1.msra.mxu0 %v1681
  %1699 = vmatprep.subr.mxu0 0.0
  %1700 = vmatpush1.msra.mxu0 %v1682
  %1701 = vmatprep.subr.mxu0 0.0
  %1702 = vmatpush1.msra.mxu0 %v1683
  %1703 = vmatprep.subr.mxu0 0.0
  %1704 = vmatpush1.msra.mxu0 %v1684
  %1705 = vmatprep.subr.mxu0 0.0
  %1706 = vmatpush1.msra.mxu0 %v1685
  %1707 = vmatprep.subr.mxu0 0.0
  %1708 = vmatpush1.msra.mxu0 %v1686
  %1709 = vmatprep.subr.mxu0 0.0
  %1710 = vmatpush1.msra.mxu0 0.0
  %1711 = vmatprep.subr.mxu0 0.0
  %1712 = vmatpush1.msra.mxu0 0.0
  %1713 = vmatprep.subr.mxu0 0.0
  %1714 = vmatpush1.msra.mxu0 0.0
  %1715 = vmatprep.subr.mxu0 0.0
  %1716 = vmatpush1.msra.mxu0 0.0
  %1717 = vmatprep.subr.mxu0 0.0
  %1718 = vmatpush1.msra.mxu0 0.0
  %1719 = vmatprep.subr.mxu0 0.0
  %1720 = vmatpush1.msra.mxu0 0.0
  %1721 = vmatprep.subr.mxu0 0.0
  %1722 = vmatpush1.msra.mxu0 0.0
  %1723 = vmatprep.subr.mxu0 0.0
  %1724 = vmatpush1.msra.mxu0 0.0
  %1725 = vmatprep.subr.mxu0 0.0
  %1726 = vmatpush1.msra.mxu0 0.0
  %1727 = vmatprep.subr.mxu0 0.0
  %1728 = vmatpush1.msra.mxu0 0.0
  %1729 = vmatprep.subr.mxu0 0.0
  %1730 = vmatpush1.msra.mxu0 0.0
  %1731 = vmatprep.subr.mxu0 0.0
  %1732 = vmatpush1.msra.mxu0 0.0
  %1733 = vmatprep.subr.mxu0 0.0
  %1734 = vmatpush1.msra.mxu0 0.0
  %1735 = vmatprep.subr.mxu0 0.0
  %1736 = vmatpush1.msra.mxu0 0.0
  %1737 = vmatprep.subr.mxu0 0.0
  %1738 = vmatpush1.msra.mxu0 0.0
  %1739 = vmatprep.subr.mxu0 0.0
  %1740 = vmatpush1.msra.mxu0 0.0
  %1741 = vmatprep.subr.mxu0 0.0
  %1742 = vmatpush1.msra.mxu0 0.0
  %1743 = vmatprep.subr.mxu0 0.0
  %1744 = vmatpush1.msra.mxu0 0.0
  %1745 = vmatprep.subr.mxu0 0.0
  %1746 = vmatpush1.msra.mxu0 0.0
  %1747 = vmatprep.subr.mxu0 0.0
  %1748 = vmatpush1.msra.mxu0 0.0
  %1749 = vmatprep.subr.mxu0 0.0
  %1750 = vmatpush1.msra.mxu0 0.0
  %1751 = vmatprep.subr.mxu0 0.0
  %1752 = vmatpush1.msra.mxu0 0.0
  %1753 = vmatprep.subr.mxu0 0.0
  %1754 = vmatpush1.msra.mxu0 0.0
  %1755 = vmatprep.subr.mxu0 0.0
  %1756 = vmatpush1.msra.mxu0 0.0
  %1757 = vmatprep.mubr.f32.mxu0 0.0
  %1758 = vmatmul.mubr.f32.gmra.mrb[0].mxu0 %v1688
  %v1759 = vpop.f32.mrb[0].mxu0
  %v1760 = vadd.f32 0.0, %v1759
  %v1761 = vpop.f32.mrb[0].mxu0
  %1762 = vmatprep.mubr.f32.mxu0 0.0
  %1763 = vmatmul.mubr.f32.gmra.mrb[0].mxu0 %v1691
  %v1764 = vpop.f32.mrb[0].mxu0
  %v1765 = vadd.f32 0.0, %v1764
  %v1766 = vpop.f32.mrb[0].mxu0
  %1767 = vdwg.mxu0
  %1770 = vrot.lane.b32.xlu0 %v1760, 64
  %v1771 = vpop.permute.xlu0 %1770
  %1772 = vrot.lane.b32.xlu0 %v1765, 64
  %v1773 = vpop.permute.xlu0 %1772
  %v1774 = vsel %vm188, %v1771, 0
  %v1776 = vsel %vm188, %v1773, 0
  %1778 = vmatprep.subr.mxu0 0.0
  %1779 = vmatpush1.msra.mxu0 %v79
  %1780 = vmatprep.subr.mxu0 0.0
  %1781 = vmatpush1.msra.mxu0 0.0
  %1782 = vmatprep.subr.mxu0 0.0
  %1783 = vmatpush1.msra.mxu0 0.0
  %1784 = vmatprep.subr.mxu0 0.0
  %1785 = vmatpush1.msra.mxu0 0.0
  %1786 = vmatprep.subr.mxu0 0.0
  %1787 = vmatpush1.msra.mxu0 0.0
  %1788 = vmatprep.subr.mxu0 0.0
  %1789 = vmatpush1.msra.mxu0 0.0
  %1790 = vmatprep.subr.mxu0 0.0
  %1791 = vmatpush1.msra.mxu0 0.0
  %1792 = vmatprep.subr.mxu0 0.0
  %1793 = vmatpush1.msra.mxu0 0.0
  %1794 = vmatprep.subr.mxu0 0.0
  %1795 = vmatpush1.msra.mxu0 0.0
  %1796 = vmatprep.subr.mxu0 0.0
  %1797 = vmatpush1.msra.mxu0 0.0
  %1798 = vmatprep.subr.mxu0 0.0
  %1799 = vmatpush1.msra.mxu0 0.0
  %1800 = vmatprep.subr.mxu0 0.0
  %1801 = vmatpush1.msra.mxu0 0.0
  %1802 = vmatprep.subr.mxu0 0.0
  %1803 = vmatpush1.msra.mxu0 0.0
  %1804 = vmatprep.subr.mxu0 0.0
  %1805 = vmatpush1.msra.mxu0 0.0
  %1806 = vmatprep.subr.mxu0 0.0
  %1807 = vmatpush1.msra.mxu0 0.0
  %1808 = vmatprep.subr.mxu0 0.0
  %1809 = vmatpush1.msra.mxu0 0.0
  %1810 = vmatprep.subr.mxu0 0.0
  %1811 = vmatpush1.msra.mxu0 0.0
  %1812 = vmatprep.subr.mxu0 0.0
  %1813 = vmatpush1.msra.mxu0 0.0
  %1814 = vmatprep.subr.mxu0 0.0
  %1815 = vmatpush1.msra.mxu0 0.0
  %1816 = vmatprep.subr.mxu0 0.0
  %1817 = vmatpush1.msra.mxu0 0.0
  %1818 = vmatprep.subr.mxu0 0.0
  %1819 = vmatpush1.msra.mxu0 0.0
  %1820 = vmatprep.subr.mxu0 0.0
  %1821 = vmatpush1.msra.mxu0 0.0
  %1822 = vmatprep.subr.mxu0 0.0
  %1823 = vmatpush1.msra.mxu0 0.0
  %1824 = vmatprep.subr.mxu0 0.0
  %1825 = vmatpush1.msra.mxu0 0.0
  %1826 = vmatprep.subr.mxu0 0.0
  %1827 = vmatpush1.msra.mxu0 0.0
  %1828 = vmatprep.subr.mxu0 0.0
  %1829 = vmatpush1.msra.mxu0 0.0
  %1830 = vmatprep.subr.mxu0 0.0
  %1831 = vmatpush1.msra.mxu0 0.0
  %1832 = vmatprep.subr.mxu0 0.0
  %1833 = vmatpush1.msra.mxu0 0.0
  %1834 = vmatprep.subr.mxu0 0.0
  %1835 = vmatpush1.msra.mxu0 0.0
  %1836 = vmatprep.subr.mxu0 0.0
  %1837 = vmatpush1.msra.mxu0 0.0
  %1838 = vmatprep.subr.mxu0 0.0
  %1839 = vmatpush1.msra.mxu0 0.0
  %1840 = vmatprep.subr.mxu0 0.0
  %1841 = vmatpush1.msra.mxu0 0.0
  %1842 = vmatprep.mubr.f32.mxu0 0.0
  %1843 = vmatmul.mubr.f32.gmra.mrb[0].mxu0 %v1774
  %v1844 = vpop.f32.mrb[0].mxu0
  %v1845 = vadd.f32 0.0, %v1844
  %v1846 = vpop.f32.mrb[0].mxu0
  %1847 = vmatprep.mubr.f32.mxu0 0.0
  %1848 = vmatmul.mubr.f32.gmra.mrb[0].mxu0 %v1776
  %v1849 = vpop.f32.mrb[0].mxu0
  %v1850 = vadd.f32 0.0, %v1849
  %v1851 = vpop.f32.mrb[0].mxu0
  %1852 = vdwg.mxu0
  %v1853 = vmul.f32 %v1845, %v45
  %v1854 = vmul.f32 %v1850, %v46
  %1855 = vmatprep.subr.mxu0 0.0
  %1856 = vmatpush1.msra.mxu0 %v1853
  %1857 = vmatprep.subr.mxu0 0.0
  %1858 = vmatpush1.msra.mxu0 %v1854
  %1859 = vmatprep.subr.mxu0 0.0
  %1860 = vmatpush1.msra.mxu0 0.0
  %1861 = vmatprep.subr.mxu0 0.0
  %1862 = vmatpush1.msra.mxu0 0.0
  %1863 = vmatprep.subr.mxu0 0.0
  %1864 = vmatpush1.msra.mxu0 0.0
  %1865 = vmatprep.subr.mxu0 0.0
  %1866 = vmatpush1.msra.mxu0 0.0
  %1867 = vmatprep.subr.mxu0 0.0
  %1868 = vmatpush1.msra.mxu0 0.0
  %1869 = vmatprep.subr.mxu0 0.0
  %1870 = vmatpush1.msra.mxu0 0.0
  %1871 = vmatprep.subr.mxu0 0.0
  %1872 = vmatpush1.msra.mxu0 0.0
  %1873 = vmatprep.subr.mxu0 0.0
  %1874 = vmatpush1.msra.mxu0 0.0
  %1875 = vmatprep.subr.mxu0 0.0
  %1876 = vmatpush1.msra.mxu0 0.0
  %1877 = vmatprep.subr.mxu0 0.0
  %1878 = vmatpush1.msra.mxu0 0.0
  %1879 = vmatprep.subr.mxu0 0.0
  %1880 = vmatpush1.msra.mxu0 0.0
  %1881 = vmatprep.subr.mxu0 0.0
  %1882 = vmatpush1.msra.mxu0 0.0
  %1883 = vmatprep.subr.mxu0 0.0
  %1884 = vmatpush1.msra.mxu0 0.0
  %1885 = vmatprep.subr.mxu0 0.0
  %1886 = vmatpush1.msra.mxu0 0.0
  %1887 = vmatprep.subr.mxu0 0.0
  %1888 = vmatpush1.msra.mxu0 0.0
  %1889 = vmatprep.subr.mxu0 0.0
  %1890 = vmatpush1.msra.mxu0 0.0
  %1891 = vmatprep.subr.mxu0 0.0
  %1892 = vmatpush1.msra.mxu0 0.0
  %1893 = vmatprep.subr.mxu0 0.0
  %1894 = vmatpush1.msra.mxu0 0.0
  %1895 = vmatprep.subr.mxu0 0.0
  %1896 = vmatpush1.msra.mxu0 0.0
  %1897 = vmatprep.subr.mxu0 0.0
  %1898 = vmatpush1.msra.mxu0 0.0
  %1899 = vmatprep.subr.mxu0 0.0
  %1900 = vmatpush1.msra.mxu0 0.0
  %1901 = vmatprep.subr.mxu0 0.0
  %1902 = vmatpush1.msra.mxu0 0.0
  %1903 = vmatprep.subr.mxu0 0.0
  %1904 = vmatpush1.msra.mxu0 0.0
  %1905 = vmatprep.subr.mxu0 0.0
  %1906 = vmatpush1.msra.mxu0 0.0
  %1907 = vmatprep.subr.mxu0 0.0
  %1908 = vmatpush1.msra.mxu0 0.0
  %1909 = vmatprep.subr.mxu0 0.0
  %1910 = vmatpush1.msra.mxu0 0.0
  %1911 = vmatprep.subr.mxu0 0.0
  %1912 = vmatpush1.msra.mxu0 0.0
  %1913 = vmatprep.subr.mxu0 0.0
  %1914 = vmatpush1.msra.mxu0 0.0
  %1915 = vmatprep.subr.mxu0 0.0
  %1916 = vmatpush1.msra.mxu0 0.0
  %1917 = vmatprep.subr.mxu0 0.0
  %1918 = vmatpush1.msra.mxu0 0.0
  %1919 = vmatprep.mubr.f32.mxu0 0.0
  %1920 = vmatmul.mubr.f32.gmra.mrb[0].mxu0 %v271
  %v1921 = vpop.f32.mrb[0].mxu0
  %v1922 = vadd.f32 0.0, %v1921
  %v1923 = vpop.f32.mrb[0].mxu0
  %1924 = vdwg.mxu0
  %v1925 = vlaneseq
  %v1926 = vshrl.u32 %v1925, 7
  %v1927 = vsub.s32 0, %v1926
  %v1928 = vrot.slane %v1922, %v1927
  %1929 = vrot.lane.b32.xlu0 %v1760, 56
  %v1930 = vpop.permute.xlu0 %1929
  %1931 = vrot.lane.b32.xlu0 %v1765, 56
  %v1932 = vpop.permute.xlu0 %1931
  %v1933 = vsel %vm188, %v1930, 0
  %v1935 = vsel %vm188, %v1932, 0
  %1937 = vmatprep.subr.mxu0 0.0
  %1938 = vmatpush1.msra.mxu0 %v79
  %1939 = vmatprep.subr.mxu0 0.0
  %1940 = vmatpush1.msra.mxu0 0.0
  %1941 = vmatprep.subr.mxu0 0.0
  %1942 = vmatpush1.msra.mxu0 0.0
  %1943 = vmatprep.subr.mxu0 0.0
  %1944 = vmatpush1.msra.mxu0 0.0
  %1945 = vmatprep.subr.mxu0 0.0
  %1946 = vmatpush1.msra.mxu0 0.0
  %1947 = vmatprep.subr.mxu0 0.0
  %1948 = vmatpush1.msra.mxu0 0.0
  %1949 = vmatprep.subr.mxu0 0.0
  %1950 = vmatpush1.msra.mxu0 0.0
  %1951 = vmatprep.subr.mxu0 0.0
  %1952 = vmatpush1.msra.mxu0 0.0
  %1953 = vmatprep.subr.mxu0 0.0
  %1954 = vmatpush1.msra.mxu0 0.0
  %1955 = vmatprep.subr.mxu0 0.0
  %1956 = vmatpush1.msra.mxu0 0.0
  %1957 = vmatprep.subr.mxu0 0.0
  %1958 = vmatpush1.msra.mxu0 0.0
  %1959 = vmatprep.subr.mxu0 0.0
  %1960 = vmatpush1.msra.mxu0 0.0
  %1961 = vmatprep.subr.mxu0 0.0
  %1962 = vmatpush1.msra.mxu0 0.0
  %1963 = vmatprep.subr.mxu0 0.0
  %1964 = vmatpush1.msra.mxu0 0.0
  %1965 = vmatprep.subr.mxu0 0.0
  %1966 = vmatpush1.msra.mxu0 0.0
  %1967 = vmatprep.subr.mxu0 0.0
  %1968 = vmatpush1.msra.mxu0 0.0
  %1969 = vmatprep.subr.mxu0 0.0
  %1970 = vmatpush1.msra.mxu0 0.0
  %1971 = vmatprep.subr.mxu0 0.0
  %1972 = vmatpush1.msra.mxu0 0.0
  %1973 = vmatprep.subr.mxu0 0.0
  %1974 = vmatpush1.msra.mxu0 0.0
  %1975 = vmatprep.subr.mxu0 0.0
  %1976 = vmatpush1.msra.mxu0 0.0
  %1977 = vmatprep.subr.mxu0 0.0
  %1978 = vmatpush1.msra.mxu0 0.0
  %1979 = vmatprep.subr.mxu0 0.0
  %1980 = vmatpush1.msra.mxu0 0.0
  %1981 = vmatprep.subr.mxu0 0.0
  %1982 = vmatpush1.msra.mxu0 0.0
  %1983 = vmatprep.subr.mxu0 0.0
  %1984 = vmatpush1.msra.mxu0 0.0
  %1985 = vmatprep.subr.mxu0 0.0
  %1986 = vmatpush1.msra.mxu0 0.0
  %1987 = vmatprep.subr.mxu0 0.0
  %1988 = vmatpush1.msra.mxu0 0.0
  %1989 = vmatprep.subr.mxu0 0.0
  %1990 = vmatpush1.msra.mxu0 0.0
  %1991 = vmatprep.subr.mxu0 0.0
  %1992 = vmatpush1.msra.mxu0 0.0
  %1993 = vmatprep.subr.mxu0 0.0
  %1994 = vmatpush1.msra.mxu0 0.0
  %1995 = vmatprep.subr.mxu0 0.0
  %1996 = vmatpush1.msra.mxu0 0.0
  %1997 = vmatprep.subr.mxu0 0.0
  %1998 = vmatpush1.msra.mxu0 0.0
  %1999 = vmatprep.subr.mxu0 0.0
  %2000 = vmatpush1.msra.mxu0 0.0
  %2001 = vmatprep.mubr.f32.mxu0 0.0
  %2002 = vmatmul.mubr.f32.gmra.mrb[0].mxu0 %v1933
  %v2003 = vpop.f32.mrb[0].mxu0
  %v2004 = vadd.f32 %v1928, %v2003
  %v2005 = vpop.f32.mrb[0].mxu0
  %2006 = vmatprep.mubr.f32.mxu0 0.0
  %2007 = vmatmul.mubr.f32.gmra.mrb[0].mxu0 %v1935
  %v2008 = vpop.f32.mrb[0].mxu0
  %v2009 = vadd.f32 %v1928, %v2008
  %v2010 = vpop.f32.mrb[0].mxu0
  %2011 = vdwg.mxu0
  %vm2012 = vcmp.gt.f32.partialorder %v2004, 0.0
  %vm2013 = vcmp.gt.f32.partialorder %v2009, 0.0
  %v2014 = vmul.f32 %v2004, 0.2
  %v2015 = vmul.f32 %v2009, 0.2
  %v2016 = vsel %vm2012, %v2004, %v2014
  %v2017 = vsel %vm2013, %v2009, %v2015
  %v2018 = vsel %vm43, %v2016, -1e+30
  %v2019 = vsel %vm44, %v2017, -1e+30
  %2020 = vmax.xlane.f32.xlu0 %v2018
  %v2021 = vpop.xlane.xlu0 %2020
  %2022 = vmax.xlane.f32.xlu0 %v2019
  %v2023 = vpop.xlane.xlu0 %2022
  %v2024 = vsub.f32 %v2018, %v2021
  %v2025 = vsub.f32 %v2019, %v2023
  %v2026 = vmul.f32 %v2024, 1.442695
  %v2027 = vpow.pop %v2026
  %v2028 = vmul.f32 %v2025, 1.442695
  %v2029 = vpow.pop %v2028
  %v2030 = vsel %vm43, %v2027, 0.0
  %v2031 = vsel %vm44, %v2029, 0.0
  %2032 = vmatprep.subr.mxu0 0.0
  %2033 = vmatpush1.msra.mxu0 %v80
  %2034 = vmatprep.subr.mxu0 0.0
  %2035 = vmatpush1.msra.mxu0 %v81
  %2036 = vmatprep.subr.mxu0 0.0
  %2037 = vmatpush1.msra.mxu0 %v82
  %2038 = vmatprep.subr.mxu0 0.0
  %2039 = vmatpush1.msra.mxu0 %v83
  %2040 = vmatprep.subr.mxu0 0.0
  %2041 = vmatpush1.msra.mxu0 %v84
  %2042 = vmatprep.subr.mxu0 0.0
  %2043 = vmatpush1.msra.mxu0 %v85
  %2044 = vmatprep.subr.mxu0 0.0
  %2045 = vmatpush1.msra.mxu0 %v86
  %2046 = vmatprep.subr.mxu0 0.0
  %2047 = vmatpush1.msra.mxu0 %v87
  %2048 = vmatprep.subr.mxu0 0.0
  %2049 = vmatpush1.msra.mxu0 %v88
  %2050 = vmatprep.subr.mxu0 0.0
  %2051 = vmatpush1.msra.mxu0 %v89
  %2052 = vmatprep.subr.mxu0 0.0
  %2053 = vmatpush1.msra.mxu0 %v90
  %2054 = vmatprep.subr.mxu0 0.0
  %2055 = vmatpush1.msra.mxu0 %v91
  %2056 = vmatprep.subr.mxu0 0.0
  %2057 = vmatpush1.msra.mxu0 %v92
  %2058 = vmatprep.subr.mxu0 0.0
  %2059 = vmatpush1.msra.mxu0 %v93
  %2060 = vmatprep.subr.mxu0 0.0
  %2061 = vmatpush1.msra.mxu0 %v94
  %2062 = vmatprep.subr.mxu0 0.0
  %2063 = vmatpush1.msra.mxu0 %v95
  %2064 = vmatprep.subr.mxu0 0.0
  %2065 = vmatpush1.msra.mxu0 0.0
  %2066 = vmatprep.subr.mxu0 0.0
  %2067 = vmatpush1.msra.mxu0 0.0
  %2068 = vmatprep.subr.mxu0 0.0
  %2069 = vmatpush1.msra.mxu0 0.0
  %2070 = vmatprep.subr.mxu0 0.0
  %2071 = vmatpush1.msra.mxu0 0.0
  %2072 = vmatprep.subr.mxu0 0.0
  %2073 = vmatpush1.msra.mxu0 0.0
  %2074 = vmatprep.subr.mxu0 0.0
  %2075 = vmatpush1.msra.mxu0 0.0
  %2076 = vmatprep.subr.mxu0 0.0
  %2077 = vmatpush1.msra.mxu0 0.0
  %2078 = vmatprep.subr.mxu0 0.0
  %2079 = vmatpush1.msra.mxu0 0.0
  %2080 = vmatprep.subr.mxu0 0.0
  %2081 = vmatpush1.msra.mxu0 0.0
  %2082 = vmatprep.subr.mxu0 0.0
  %2083 = vmatpush1.msra.mxu0 0.0
  %2084 = vmatprep.subr.mxu0 0.0
  %2085 = vmatpush1.msra.mxu0 0.0
  %2086 = vmatprep.subr.mxu0 0.0
  %2087 = vmatpush1.msra.mxu0 0.0
  %2088 = vmatprep.subr.mxu0 0.0
  %2089 = vmatpush1.msra.mxu0 0.0
  %2090 = vmatprep.subr.mxu0 0.0
  %2091 = vmatpush1.msra.mxu0 0.0
  %2092 = vmatprep.subr.mxu0 0.0
  %2093 = vmatpush1.msra.mxu0 0.0
  %2094 = vmatprep.subr.mxu0 0.0
  %2095 = vmatpush1.msra.mxu0 0.0
  %2096 = vmatprep.mubr.f32.mxu0 0.0
  %2097 = vmatmul.mubr.f32.gmra.mrb[0].mxu0 %v2030
  %v2098 = vpop.f32.mrb[0].mxu0
  %v2099 = vadd.f32 0.0, %v2098
  %v2100 = vpop.f32.mrb[0].mxu0
  %2101 = vmatprep.mubr.f32.mxu0 0.0
  %2102 = vmatmul.mubr.f32.gmra.mrb[0].mxu0 %v2031
  %v2103 = vpop.f32.mrb[0].mxu0
  %v2104 = vadd.f32 0.0, %v2103
  %v2105 = vpop.f32.mrb[0].mxu0
  %2106 = vdwg.mxu0
  %v2107 = vmax.f32 %v2099, 1e-20
  %v2108 = vmax.f32 %v2104, 1e-20
  %v2109 = vrcp.pop %v2107
  %v2110 = vrcp.pop %v2108
  %v2112 = vsel %vm188, %v2109, 0
  %v2115 = vsel %vm188, %v2110, 0
  %2117 = vmatprep.subr.mxu0 0.0
  %2118 = vmatpush1.msra.mxu0 %v79
  %2119 = vmatprep.subr.mxu0 0.0
  %2120 = vmatpush1.msra.mxu0 0.0
  %2121 = vmatprep.subr.mxu0 0.0
  %2122 = vmatpush1.msra.mxu0 0.0
  %2123 = vmatprep.subr.mxu0 0.0
  %2124 = vmatpush1.msra.mxu0 0.0
  %2125 = vmatprep.subr.mxu0 0.0
  %2126 = vmatpush1.msra.mxu0 0.0
  %2127 = vmatprep.subr.mxu0 0.0
  %2128 = vmatpush1.msra.mxu0 0.0
  %2129 = vmatprep.subr.mxu0 0.0
  %2130 = vmatpush1.msra.mxu0 0.0
  %2131 = vmatprep.subr.mxu0 0.0
  %2132 = vmatpush1.msra.mxu0 0.0
  %2133 = vmatprep.subr.mxu0 0.0
  %2134 = vmatpush1.msra.mxu0 0.0
  %2135 = vmatprep.subr.mxu0 0.0
  %2136 = vmatpush1.msra.mxu0 0.0
  %2137 = vmatprep.subr.mxu0 0.0
  %2138 = vmatpush1.msra.mxu0 0.0
  %2139 = vmatprep.subr.mxu0 0.0
  %2140 = vmatpush1.msra.mxu0 0.0
  %2141 = vmatprep.subr.mxu0 0.0
  %2142 = vmatpush1.msra.mxu0 0.0
  %2143 = vmatprep.subr.mxu0 0.0
  %2144 = vmatpush1.msra.mxu0 0.0
  %2145 = vmatprep.subr.mxu0 0.0
  %2146 = vmatpush1.msra.mxu0 0.0
  %2147 = vmatprep.subr.mxu0 0.0
  %2148 = vmatpush1.msra.mxu0 0.0
  %2149 = vmatprep.subr.mxu0 0.0
  %2150 = vmatpush1.msra.mxu0 0.0
  %2151 = vmatprep.subr.mxu0 0.0
  %2152 = vmatpush1.msra.mxu0 0.0
  %2153 = vmatprep.subr.mxu0 0.0
  %2154 = vmatpush1.msra.mxu0 0.0
  %2155 = vmatprep.subr.mxu0 0.0
  %2156 = vmatpush1.msra.mxu0 0.0
  %2157 = vmatprep.subr.mxu0 0.0
  %2158 = vmatpush1.msra.mxu0 0.0
  %2159 = vmatprep.subr.mxu0 0.0
  %2160 = vmatpush1.msra.mxu0 0.0
  %2161 = vmatprep.subr.mxu0 0.0
  %2162 = vmatpush1.msra.mxu0 0.0
  %2163 = vmatprep.subr.mxu0 0.0
  %2164 = vmatpush1.msra.mxu0 0.0
  %2165 = vmatprep.subr.mxu0 0.0
  %2166 = vmatpush1.msra.mxu0 0.0
  %2167 = vmatprep.subr.mxu0 0.0
  %2168 = vmatpush1.msra.mxu0 0.0
  %2169 = vmatprep.subr.mxu0 0.0
  %2170 = vmatpush1.msra.mxu0 0.0
  %2171 = vmatprep.subr.mxu0 0.0
  %2172 = vmatpush1.msra.mxu0 0.0
  %2173 = vmatprep.subr.mxu0 0.0
  %2174 = vmatpush1.msra.mxu0 0.0
  %2175 = vmatprep.subr.mxu0 0.0
  %2176 = vmatpush1.msra.mxu0 0.0
  %2177 = vmatprep.subr.mxu0 0.0
  %2178 = vmatpush1.msra.mxu0 0.0
  %2179 = vmatprep.subr.mxu0 0.0
  %2180 = vmatpush1.msra.mxu0 0.0
  %2181 = vmatprep.mubr.f32.mxu0 0.0
  %2182 = vmatmul.mubr.f32.gmra.mrb[0].mxu0 %v2112
  %v2183 = vpop.f32.mrb[0].mxu0
  %v2184 = vadd.f32 0.0, %v2183
  %v2185 = vpop.f32.mrb[0].mxu0
  %2186 = vmatprep.mubr.f32.mxu0 0.0
  %2187 = vmatmul.mubr.f32.gmra.mrb[0].mxu0 %v2115
  %v2188 = vpop.f32.mrb[0].mxu0
  %v2189 = vadd.f32 0.0, %v2188
  %v2190 = vpop.f32.mrb[0].mxu0
  %2191 = vdwg.mxu0
  %v2192 = vmul.f32 %v2030, %v2184
  %v2193 = vmul.f32 %v2031, %v2189
  %2194 = vmatprep.subr.mxu0 0.0
  %2195 = vmatpush1.msra.mxu0 %v1760
  %2196 = vmatprep.subr.mxu0 0.0
  %2197 = vmatpush1.msra.mxu0 %v1765
  %2198 = vmatprep.subr.mxu0 0.0
  %2199 = vmatpush1.msra.mxu0 0.0
  %2200 = vmatprep.subr.mxu0 0.0
  %2201 = vmatpush1.msra.mxu0 0.0
  %2202 = vmatprep.subr.mxu0 0.0
  %2203 = vmatpush1.msra.mxu0 0.0
  %2204 = vmatprep.subr.mxu0 0.0
  %2205 = vmatpush1.msra.mxu0 0.0
  %2206 = vmatprep.subr.mxu0 0.0
  %2207 = vmatpush1.msra.mxu0 0.0
  %2208 = vmatprep.subr.mxu0 0.0
  %2209 = vmatpush1.msra.mxu0 0.0
  %2210 = vmatprep.subr.mxu0 0.0
  %2211 = vmatpush1.msra.mxu0 0.0
  %2212 = vmatprep.subr.mxu0 0.0
  %2213 = vmatpush1.msra.mxu0 0.0
  %2214 = vmatprep.subr.mxu0 0.0
  %2215 = vmatpush1.msra.mxu0 0.0
  %2216 = vmatprep.subr.mxu0 0.0
  %2217 = vmatpush1.msra.mxu0 0.0
  %2218 = vmatprep.subr.mxu0 0.0
  %2219 = vmatpush1.msra.mxu0 0.0
  %2220 = vmatprep.subr.mxu0 0.0
  %2221 = vmatpush1.msra.mxu0 0.0
  %2222 = vmatprep.subr.mxu0 0.0
  %2223 = vmatpush1.msra.mxu0 0.0
  %2224 = vmatprep.subr.mxu0 0.0
  %2225 = vmatpush1.msra.mxu0 0.0
  %2226 = vmatprep.subr.mxu0 0.0
  %2227 = vmatpush1.msra.mxu0 0.0
  %2228 = vmatprep.subr.mxu0 0.0
  %2229 = vmatpush1.msra.mxu0 0.0
  %2230 = vmatprep.subr.mxu0 0.0
  %2231 = vmatpush1.msra.mxu0 0.0
  %2232 = vmatprep.subr.mxu0 0.0
  %2233 = vmatpush1.msra.mxu0 0.0
  %2234 = vmatprep.subr.mxu0 0.0
  %2235 = vmatpush1.msra.mxu0 0.0
  %2236 = vmatprep.subr.mxu0 0.0
  %2237 = vmatpush1.msra.mxu0 0.0
  %2238 = vmatprep.subr.mxu0 0.0
  %2239 = vmatpush1.msra.mxu0 0.0
  %2240 = vmatprep.subr.mxu0 0.0
  %2241 = vmatpush1.msra.mxu0 0.0
  %2242 = vmatprep.subr.mxu0 0.0
  %2243 = vmatpush1.msra.mxu0 0.0
  %2244 = vmatprep.subr.mxu0 0.0
  %2245 = vmatpush1.msra.mxu0 0.0
  %2246 = vmatprep.subr.mxu0 0.0
  %2247 = vmatpush1.msra.mxu0 0.0
  %2248 = vmatprep.subr.mxu0 0.0
  %2249 = vmatpush1.msra.mxu0 0.0
  %2250 = vmatprep.subr.mxu0 0.0
  %2251 = vmatpush1.msra.mxu0 0.0
  %2252 = vmatprep.subr.mxu0 0.0
  %2253 = vmatpush1.msra.mxu0 0.0
  %2254 = vmatprep.subr.mxu0 0.0
  %2255 = vmatpush1.msra.mxu0 0.0
  %2256 = vmatprep.subr.mxu0 0.0
  %2257 = vmatpush1.msra.mxu0 0.0
  %2258 = vmatprep.mubr.f32.mxu0 0.0
  %2259 = vmatmul.mubr.f32.gmra.mrb[0].mxu0 %v613
  %v2260 = vpop.f32.mrb[0].mxu0
  %v2261 = vadd.f32 0.0, %v2260
  %v2262 = vpop.f32.mrb[0].mxu0
  %2263 = vmatprep.mubr.f32.mxu0 0.0
  %2264 = vmatmul.mubr.f32.gmra.mrb[0].mxu0 %v616
  %v2265 = vpop.f32.mrb[0].mxu0
  %v2266 = vadd.f32 0.0, %v2265
  %v2267 = vpop.f32.mrb[0].mxu0
  %2268 = vmatprep.mubr.f32.mxu0 0.0
  %2269 = vmatmul.mubr.f32.gmra.mrb[0].mxu0 %v619
  %v2270 = vpop.f32.mrb[0].mxu0
  %v2271 = vadd.f32 0.0, %v2270
  %v2272 = vpop.f32.mrb[0].mxu0
  %2273 = vmatprep.mubr.f32.mxu0 0.0
  %2274 = vmatmul.mubr.f32.gmra.mrb[0].mxu0 %v622
  %v2275 = vpop.f32.mrb[0].mxu0
  %v2276 = vadd.f32 0.0, %v2275
  %v2277 = vpop.f32.mrb[0].mxu0
  %2278 = vmatprep.mubr.f32.mxu0 0.0
  %2279 = vmatmul.mubr.f32.gmra.mrb[0].mxu0 %v625
  %v2280 = vpop.f32.mrb[0].mxu0
  %v2281 = vadd.f32 0.0, %v2280
  %v2282 = vpop.f32.mrb[0].mxu0
  %2283 = vmatprep.mubr.f32.mxu0 0.0
  %2284 = vmatmul.mubr.f32.gmra.mrb[0].mxu0 %v628
  %v2285 = vpop.f32.mrb[0].mxu0
  %v2286 = vadd.f32 0.0, %v2285
  %v2287 = vpop.f32.mrb[0].mxu0
  %2288 = vmatprep.mubr.f32.mxu0 0.0
  %2289 = vmatmul.mubr.f32.gmra.mrb[0].mxu0 %v631
  %v2290 = vpop.f32.mrb[0].mxu0
  %v2291 = vadd.f32 0.0, %v2290
  %v2292 = vpop.f32.mrb[0].mxu0
  %2293 = vmatprep.mubr.f32.mxu0 0.0
  %2294 = vmatmul.mubr.f32.gmra.mrb[0].mxu0 %v634
  %v2295 = vpop.f32.mrb[0].mxu0
  %v2296 = vadd.f32 0.0, %v2295
  %v2297 = vpop.f32.mrb[0].mxu0
  %2298 = vmatprep.mubr.f32.mxu0 0.0
  %2299 = vmatmul.mubr.f32.gmra.mrb[0].mxu0 %v637
  %v2300 = vpop.f32.mrb[0].mxu0
  %v2301 = vadd.f32 0.0, %v2300
  %v2302 = vpop.f32.mrb[0].mxu0
  %2303 = vmatprep.mubr.f32.mxu0 0.0
  %2304 = vmatmul.mubr.f32.gmra.mrb[0].mxu0 %v640
  %v2305 = vpop.f32.mrb[0].mxu0
  %v2306 = vadd.f32 0.0, %v2305
  %v2307 = vpop.f32.mrb[0].mxu0
  %2308 = vmatprep.mubr.f32.mxu0 0.0
  %2309 = vmatmul.mubr.f32.gmra.mrb[0].mxu0 %v643
  %v2310 = vpop.f32.mrb[0].mxu0
  %v2311 = vadd.f32 0.0, %v2310
  %v2312 = vpop.f32.mrb[0].mxu0
  %2313 = vmatprep.mubr.f32.mxu0 0.0
  %2314 = vmatmul.mubr.f32.gmra.mrb[0].mxu0 %v646
  %v2315 = vpop.f32.mrb[0].mxu0
  %v2316 = vadd.f32 0.0, %v2315
  %v2317 = vpop.f32.mrb[0].mxu0
  %2318 = vmatprep.mubr.f32.mxu0 0.0
  %2319 = vmatmul.mubr.f32.gmra.mrb[0].mxu0 %v649
  %v2320 = vpop.f32.mrb[0].mxu0
  %v2321 = vadd.f32 0.0, %v2320
  %v2322 = vpop.f32.mrb[0].mxu0
  %2323 = vmatprep.mubr.f32.mxu0 0.0
  %2324 = vmatmul.mubr.f32.gmra.mrb[0].mxu0 %v652
  %v2325 = vpop.f32.mrb[0].mxu0
  %v2326 = vadd.f32 0.0, %v2325
  %v2327 = vpop.f32.mrb[0].mxu0
  %2328 = vmatprep.mubr.f32.mxu0 0.0
  %2329 = vmatmul.mubr.f32.gmra.mrb[0].mxu0 %v655
  %v2330 = vpop.f32.mrb[0].mxu0
  %v2331 = vadd.f32 0.0, %v2330
  %v2332 = vpop.f32.mrb[0].mxu0
  %2333 = vmatprep.mubr.f32.mxu0 0.0
  %2334 = vmatmul.mubr.f32.gmra.mrb[0].mxu0 %v658
  %v2335 = vpop.f32.mrb[0].mxu0
  %v2336 = vadd.f32 0.0, %v2335
  %v2337 = vpop.f32.mrb[0].mxu0
  %2338 = vdwg.mxu0
  %v2339 = vmul.f32 %v2261, %v63
  %v2340 = vmul.f32 %v2266, %v64
  %v2341 = vmul.f32 %v2271, %v65
  %v2342 = vmul.f32 %v2276, %v66
  %v2343 = vmul.f32 %v2281, %v67
  %v2344 = vmul.f32 %v2286, %v68
  %v2345 = vmul.f32 %v2291, %v69
  %v2346 = vmul.f32 %v2296, %v70
  %v2347 = vmul.f32 %v2301, %v71
  %v2348 = vmul.f32 %v2306, %v72
  %v2349 = vmul.f32 %v2311, %v73
  %v2350 = vmul.f32 %v2316, %v74
  %v2351 = vmul.f32 %v2321, %v75
  %v2352 = vmul.f32 %v2326, %v76
  %v2353 = vmul.f32 %v2331, %v77
  %v2354 = vmul.f32 %v2336, %v78
  %2355 = vmatprep.subr.mxu0 0.0
  %2356 = vmatpush1.msra.mxu0 %v2339
  %2357 = vmatprep.subr.mxu0 0.0
  %2358 = vmatpush1.msra.mxu0 %v2340
  %2359 = vmatprep.subr.mxu0 0.0
  %2360 = vmatpush1.msra.mxu0 %v2341
  %2361 = vmatprep.subr.mxu0 0.0
  %2362 = vmatpush1.msra.mxu0 %v2342
  %2363 = vmatprep.subr.mxu0 0.0
  %2364 = vmatpush1.msra.mxu0 %v2343
  %2365 = vmatprep.subr.mxu0 0.0
  %2366 = vmatpush1.msra.mxu0 %v2344
  %2367 = vmatprep.subr.mxu0 0.0
  %2368 = vmatpush1.msra.mxu0 %v2345
  %2369 = vmatprep.subr.mxu0 0.0
  %2370 = vmatpush1.msra.mxu0 %v2346
  %2371 = vmatprep.subr.mxu0 0.0
  %2372 = vmatpush1.msra.mxu0 %v2347
  %2373 = vmatprep.subr.mxu0 0.0
  %2374 = vmatpush1.msra.mxu0 %v2348
  %2375 = vmatprep.subr.mxu0 0.0
  %2376 = vmatpush1.msra.mxu0 %v2349
  %2377 = vmatprep.subr.mxu0 0.0
  %2378 = vmatpush1.msra.mxu0 %v2350
  %2379 = vmatprep.subr.mxu0 0.0
  %2380 = vmatpush1.msra.mxu0 %v2351
  %2381 = vmatprep.subr.mxu0 0.0
  %2382 = vmatpush1.msra.mxu0 %v2352
  %2383 = vmatprep.subr.mxu0 0.0
  %2384 = vmatpush1.msra.mxu0 %v2353
  %2385 = vmatprep.subr.mxu0 0.0
  %2386 = vmatpush1.msra.mxu0 %v2354
  %2387 = vmatprep.subr.mxu0 0.0
  %2388 = vmatpush1.msra.mxu0 0.0
  %2389 = vmatprep.subr.mxu0 0.0
  %2390 = vmatpush1.msra.mxu0 0.0
  %2391 = vmatprep.subr.mxu0 0.0
  %2392 = vmatpush1.msra.mxu0 0.0
  %2393 = vmatprep.subr.mxu0 0.0
  %2394 = vmatpush1.msra.mxu0 0.0
  %2395 = vmatprep.subr.mxu0 0.0
  %2396 = vmatpush1.msra.mxu0 0.0
  %2397 = vmatprep.subr.mxu0 0.0
  %2398 = vmatpush1.msra.mxu0 0.0
  %2399 = vmatprep.subr.mxu0 0.0
  %2400 = vmatpush1.msra.mxu0 0.0
  %2401 = vmatprep.subr.mxu0 0.0
  %2402 = vmatpush1.msra.mxu0 0.0
  %2403 = vmatprep.subr.mxu0 0.0
  %2404 = vmatpush1.msra.mxu0 0.0
  %2405 = vmatprep.subr.mxu0 0.0
  %2406 = vmatpush1.msra.mxu0 0.0
  %2407 = vmatprep.subr.mxu0 0.0
  %2408 = vmatpush1.msra.mxu0 0.0
  %2409 = vmatprep.subr.mxu0 0.0
  %2410 = vmatpush1.msra.mxu0 0.0
  %2411 = vmatprep.subr.mxu0 0.0
  %2412 = vmatpush1.msra.mxu0 0.0
  %2413 = vmatprep.subr.mxu0 0.0
  %2414 = vmatpush1.msra.mxu0 0.0
  %2415 = vmatprep.subr.mxu0 0.0
  %2416 = vmatpush1.msra.mxu0 0.0
  %2417 = vmatprep.subr.mxu0 0.0
  %2418 = vmatpush1.msra.mxu0 0.0
  %2419 = vmatprep.mubr.f32.mxu0 0.0
  %2420 = vmatmul.mubr.f32.gmra.mrb[0].mxu0 %v2192
  %v2421 = vpop.f32.mrb[0].mxu0
  %v2422 = vadd.f32 0.0, %v2421
  %v2423 = vpop.f32.mrb[0].mxu0
  %2424 = vmatprep.mubr.f32.mxu0 0.0
  %2425 = vmatmul.mubr.f32.gmra.mrb[0].mxu0 %v2193
  %v2426 = vpop.f32.mrb[0].mxu0
  %v2427 = vadd.f32 0.0, %v2426
  %v2428 = vpop.f32.mrb[0].mxu0
  %2429 = vdwg.mxu0
  %v2430 = vsel %vm906, %v2422, 0.0
  %2431 = vadd.xlane.f32.xlu0 %v2430
  %v2432 = vpop.xlane.xlu0 %2431
  %v2433 = vsel %vm906, %v2427, 0.0
  %2434 = vadd.xlane.f32.xlu0 %v2433
  %v2435 = vpop.xlane.xlu0 %2434
  %v2436 = vmul.f32 %v2432, %v1656
  %v2437 = vmul.f32 %v2435, %v1656
  %v2438 = vsub.f32 %v2422, %v2436
  %v2439 = vsub.f32 %v2427, %v2437
  %v2440 = vmul.f32 %v2438, %v2438
  %v2441 = vmul.f32 %v2439, %v2439
  %v2442 = vsel %vm906, %v2440, 0.0
  %2443 = vadd.xlane.f32.xlu0 %v2442
  %v2444 = vpop.xlane.xlu0 %2443
  %v2445 = vsel %vm906, %v2441, 0.0
  %2446 = vadd.xlane.f32.xlu0 %v2445
  %v2447 = vpop.xlane.xlu0 %2446
  %v2448 = vmul.f32 %v2444, %v1656
  %v2449 = vmul.f32 %v2447, %v1656
  %v2450 = vadd.f32 %v2448, 1e-05
  %v2451 = vadd.f32 %v2449, 1e-05
  %v2452 = vrsqrt.pop %v2450
  %v2453 = vrsqrt.pop %v2451
  %v2454 = vmul.f32 %v2438, %v2452
  %v2455 = vmul.f32 %v2439, %v2453
  %v2456 = vmax.f32 %v2454, 0.0
  %v2457 = vmax.f32 %v2455, 0.0
  %v2458 = vld [vmem:[%s10] sm:$0xff]
  %v2459 = vld [vmem:[%s10 + $0x8] sm:$0xff]
  %v2460 = vld [vmem:[%s10 + $0x10] sm:$0xff]
  %v2461 = vld [vmem:[%s10 + $0x18] sm:$0xff]
  %v2462 = vld [vmem:[%s10 + $0x20] sm:$0xff]
  %v2463 = vld [vmem:[%s10 + $0x28] sm:$0xff]
  %v2464 = vld [vmem:[%s10 + $0x30] sm:$0xff]
  %v2465 = vld [vmem:[%s10 + $0x38] sm:$0xff]
  %v2466 = vld [vmem:[%s11] sm:$0x1]
  %v2468 = vlaneseq
  %v2469 = vshrl.u32 %v2468, 7
  %v2470 = vsub.s32 0, %v2469
  %v2471 = vrot.slane %v2466, %v2470
  %v2474 = vsel %vm906, %v2456, 0
  %v2477 = vsel %vm906, %v2457, 0
  %2479 = vmatprep.subr.mxu0 0.0
  %2480 = vmatpush1.msra.mxu0 %v2458
  %2481 = vmatprep.subr.mxu0 0.0
  %2482 = vmatpush1.msra.mxu0 %v2459
  %2483 = vmatprep.subr.mxu0 0.0
  %2484 = vmatpush1.msra.mxu0 %v2460
  %2485 = vmatprep.subr.mxu0 0.0
  %2486 = vmatpush1.msra.mxu0 %v2461
  %2487 = vmatprep.subr.mxu0 0.0
  %2488 = vmatpush1.msra.mxu0 %v2462
  %2489 = vmatprep.subr.mxu0 0.0
  %2490 = vmatpush1.msra.mxu0 %v2463
  %2491 = vmatprep.subr.mxu0 0.0
  %2492 = vmatpush1.msra.mxu0 %v2464
  %2493 = vmatprep.subr.mxu0 0.0
  %2494 = vmatpush1.msra.mxu0 %v2465
  %2495 = vmatprep.subr.mxu0 0.0
  %2496 = vmatpush1.msra.mxu0 0.0
  %2497 = vmatprep.subr.mxu0 0.0
  %2498 = vmatpush1.msra.mxu0 0.0
  %2499 = vmatprep.subr.mxu0 0.0
  %2500 = vmatpush1.msra.mxu0 0.0
  %2501 = vmatprep.subr.mxu0 0.0
  %2502 = vmatpush1.msra.mxu0 0.0
  %2503 = vmatprep.subr.mxu0 0.0
  %2504 = vmatpush1.msra.mxu0 0.0
  %2505 = vmatprep.subr.mxu0 0.0
  %2506 = vmatpush1.msra.mxu0 0.0
  %2507 = vmatprep.subr.mxu0 0.0
  %2508 = vmatpush1.msra.mxu0 0.0
  %2509 = vmatprep.subr.mxu0 0.0
  %2510 = vmatpush1.msra.mxu0 0.0
  %2511 = vmatprep.subr.mxu0 0.0
  %2512 = vmatpush1.msra.mxu0 0.0
  %2513 = vmatprep.subr.mxu0 0.0
  %2514 = vmatpush1.msra.mxu0 0.0
  %2515 = vmatprep.subr.mxu0 0.0
  %2516 = vmatpush1.msra.mxu0 0.0
  %2517 = vmatprep.subr.mxu0 0.0
  %2518 = vmatpush1.msra.mxu0 0.0
  %2519 = vmatprep.subr.mxu0 0.0
  %2520 = vmatpush1.msra.mxu0 0.0
  %2521 = vmatprep.subr.mxu0 0.0
  %2522 = vmatpush1.msra.mxu0 0.0
  %2523 = vmatprep.subr.mxu0 0.0
  %2524 = vmatpush1.msra.mxu0 0.0
  %2525 = vmatprep.subr.mxu0 0.0
  %2526 = vmatpush1.msra.mxu0 0.0
  %2527 = vmatprep.subr.mxu0 0.0
  %2528 = vmatpush1.msra.mxu0 0.0
  %2529 = vmatprep.subr.mxu0 0.0
  %2530 = vmatpush1.msra.mxu0 0.0
  %2531 = vmatprep.subr.mxu0 0.0
  %2532 = vmatpush1.msra.mxu0 0.0
  %2533 = vmatprep.subr.mxu0 0.0
  %2534 = vmatpush1.msra.mxu0 0.0
  %2535 = vmatprep.subr.mxu0 0.0
  %2536 = vmatpush1.msra.mxu0 0.0
  %2537 = vmatprep.subr.mxu0 0.0
  %2538 = vmatpush1.msra.mxu0 0.0
  %2539 = vmatprep.subr.mxu0 0.0
  %2540 = vmatpush1.msra.mxu0 0.0
  %2541 = vmatprep.subr.mxu0 0.0
  %2542 = vmatpush1.msra.mxu0 0.0
  %2543 = vmatprep.mubr.f32.mxu0 0.0
  %2544 = vmatmul.mubr.f32.gmra.mrb[0].mxu0 %v2474
  %v2545 = vpop.f32.mrb[0].mxu0
  %v2546 = vadd.f32 %v2471, %v2545
  %v2547 = vpop.f32.mrb[0].mxu0
  %2548 = vmatprep.mubr.f32.mxu0 0.0
  %2549 = vmatmul.mubr.f32.gmra.mrb[0].mxu0 %v2477
  %v2550 = vpop.f32.mrb[0].mxu0
  %v2551 = vadd.f32 %v2471, %v2550
  %v2552 = vpop.f32.mrb[0].mxu0
  %2553 = vdwg.mxu0
  %vm2554 = vcmask 31744
  %2555 = vst.msk [vmem:[%s12] sm:$0xff] %vm2554, %v2546
  %2556 = vst.msk [vmem:[%s12 + $0x8] sm:$0xff] %vm2554, %v2551
  // Predicated region
  $region50: #{gat_node_forward.1} parent=0 // pred_check
    _
  $region51: #{gat_node_forward.1} parent=0 // pred_check_branch
    %2558 = sbr.rel (0) target = $region53
  $region52: #{gat_node_forward.1} parent=0 // pred_region
    _
  $region53: #{gat_node_forward.1} parent=0 // pred_fallthru
    _
  // Predicated region
  $region54: #{gat_node_forward.1} parent=0 // pred_check
    _
  $region55: #{gat_node_forward.1} parent=0 // pred_check_branch
    %2560 = sbr.rel (0) target = $region57
  $region56: #{gat_node_forward.1} parent=0 // pred_region
    _
  $region57: #{gat_node_forward.1} parent=0 // pred_fallthru
    _

</llo_original>
